<compile_context>
chip_gen: v7x
topology: tpu7x:2x2x1
jax: 0.10.0
libtpu: 0.0.40
codegen_flags: <defaults>
</compile_context>

<pallas_src>
import functools
import math

import jax
import jax.numpy as jnp
from jax.experimental import pallas as pl
from jax.experimental.pallas import tpu as pltpu

_HI = jax.lax.Precision.HIGHEST  # only used by the pure-JAX reference
_Z_LANES = 128                   # latent (25) padded to one full lane register


# ---------------------------------------------------------------------------
# Fused Pallas kernel: whole C_AE forward for a block of batch rows
# ---------------------------------------------------------------------------
def _cae_fused_kernel(x_ref,
                      w1_ref, b1_ref, w2_ref, b2_ref, w3_ref, b3_ref,
                      w4_ref, b4_ref, w5_ref, b5_ref, w6_ref, b6_ref,
                      wt1_ref, bt1_ref, wt2_ref, bt2_ref,
                      z_ref, recon_ref):
    def dense(a, w_ref, b_ref):
        # DEFAULT precision: single bf16 MXU pass, f32 accumulate.
        return jnp.dot(a, w_ref[...], preferred_element_type=jnp.float32) + b_ref[...]

    relu = lambda v: jnp.maximum(v, 0.0)

    x = x_ref[...]                                   # (TB, L1*20) bf16, lane-dense
    h1 = relu(dense(x, w1_ref, b1_ref))              # (TB, L1*5)   Conv1d(1,5,20,20)+ReLU
    f = relu(dense(h1, w2_ref, b2_ref))              # (TB, 10*L2)  Conv1d(5,10,10,10)+ReLU+Flatten
    h3 = relu(dense(f, w3_ref, b3_ref))              # (TB, 50)     Linear+ReLU
    z = dense(h3, w4_ref, b4_ref)                    # (TB, 128)    Linear -> latent (cols 25.. are 0)
    z_ref[...] = z.astype(z_ref.dtype)               # lane-dense (128) unmasked stores

    d1 = relu(dense(z, w5_ref, b5_ref))              # (TB, 50)     Linear+ReLU (pad rows of W5 = 0)
    u = relu(dense(d1, w6_ref, b6_ref))              # (TB, 10*L2)  Linear+Unflatten+ReLU
    t1 = relu(dense(u, wt1_ref, bt1_ref))            # (TB, L2*50)  ConvT1d(10,5,10,10)+ReLU
    recon_ref[...] = jax.nn.sigmoid(
        dense(t1, wt2_ref, bt2_ref)).astype(recon_ref.dtype)   # (TB, L2*200) lane-dense


# ---------------------------------------------------------------------------
# One-time weight preparation (hoisted out of the per-call forward path)
# ---------------------------------------------------------------------------
def prepare_weights(p, k):
    """Fold convs / conv-transposes (stride == kernel) into matmul weights (bf16)."""
    L1 = (k - 20) // 20 + 1
    L2 = (L1 - 10) // 10 + 1
    F = 10 * L2
    eyeL2 = jnp.eye(L2, dtype=jnp.float32)
    zpad = _Z_LANES - 25

    # Conv1d(1,5,20,20): x window t -> h1_flat[t*5+c]
    w1 = p["W1"][:, 0, :]                                            # (5, 20)
    W1e = jnp.kron(jnp.eye(L1, dtype=jnp.float32), w1.T)             # (L1*20, L1*5)
    b1e = jnp.tile(p["b1"], L1)                                      # (L1*5,)

    # Conv1d(5,10,10,10) + Flatten: h1_flat window s -> f[o*L2+s]
    w2_blk = jnp.transpose(p["W2"], (2, 1, 0)).reshape(50, 10)       # rows (p,c), cols o
    W2e = jnp.einsum("ro,st->srot", w2_blk, eyeL2).reshape(L2 * 50, F)
    if L1 * 5 > L2 * 50:                                             # conv2 drops the tail of h1
        W2e = jnp.pad(W2e, ((0, L1 * 5 - L2 * 50), (0, 0)))
    b2e = jnp.repeat(p["b2"], L2)                                    # (F,)

    # Dense encoder / decoder (PyTorch Linear: y = x @ W.T + b).
    # Latent width padded 25 -> 128 with zeros (exact: padded z cols are 0 and
    # the padded rows of W5 are 0, so they contribute nothing downstream).
    W3m = p["W3"].T
    W4m = jnp.pad(p["W4"].T, ((0, 0), (0, zpad)))                    # (50, 128)
    b4p = jnp.pad(p["b4"], (0, zpad))                                # (128,)
    W5m = jnp.pad(p["W5"].T, ((0, zpad), (0, 0)))                    # (128, 50)
    W6m = p["W6"].T

    # ConvTranspose1d(10,5,10,10): u[o*L2+s] -> t1_flat[(s*10+p)*5+c]
    wt1_blk = jnp.transpose(p["Wt1"], (0, 2, 1)).reshape(10, 50)     # (o, p*5+c)
    Wt1e = jnp.einsum("or,st->ostr", wt1_blk, eyeL2).reshape(F, L2 * 50)
    bt1e = jnp.tile(p["bt1"], L2 * 10)                               # (L2*50,)

    # ConvTranspose1d(5,1,20,20): t1_flat[s10*5+c] -> recon[s10*20+q]
    Wt2e = jnp.kron(jnp.eye(L2 * 10, dtype=jnp.float32), p["Wt2"][:, 0, :])  # (L2*50, L2*200)
    bt2e = jnp.tile(p["bt2"], L2 * 200)                              # (L2*200,)

    ws = [W1e, b1e, W2e, b2e, W3m, p["b3"], W4m, b4p,
          W5m, p["b5"], W6m, p["b6"], Wt1e, bt1e, Wt2e, bt2e]
    # Biases as (1, n) so they broadcast over the row (sublane) dim in VMEM.
    # bf16 storage: halves HBM/VMEM bytes; MXU DEFAULT precision truncates to
    # bf16 per pass anyway so matmul accuracy is unchanged.
    return tuple(a.reshape(1, -1).astype(jnp.bfloat16) if a.ndim == 1
                 else a.astype(jnp.bfloat16) for a in ws)


# ---------------------------------------------------------------------------
# Forward pass (single fused pallas_call)
# ---------------------------------------------------------------------------
def c_ae_forward(x, wp):
    B = x.shape[0]
    k = x.shape[-1]
    L1 = (k - 20) // 20 + 1
    L2 = (L1 - 10) // 10 + 1
    # The model reconstructs exactly L2*200 samples; this equals k only when
    # k % 200 == 0 (PyTorch C_AE semantics).

    # (B,1,k) -> (B,k) is a free squeeze; crop only if k is not a multiple of
    # the first conv stride (valid k has k % 200 == 0, hence no crop).
    xin = x.reshape(B, k)
    if k != L1 * 20:
        xin = xin[:, :L1 * 20]
    # bf16 input stream halves the HBM read of the dominant operand.
    if xin.dtype != jnp.bfloat16:
        xin = xin.astype(jnp.bfloat16)

    # Row-tile selection: as large as possible to amortize the ~0.35us/step
    # pipeline overhead, capped at 2048 bf16 rows (comfortably inside scoped
    # VMEM with double-buffered I/O tiles), and capped so the row grid has at
    # least 2 steps whenever B allows it so dimension_semantics=("parallel",)
    # keeps BOTH v7x TensorCores busy (no-op on v5e/v6e).
    TB = min(2048, 8 * pl.cdiv(pl.cdiv(B, 8), 2))
    grid = (pl.cdiv(B, TB),)          # no batch padding: Pallas masks the
                                      # ragged last tile; rows are independent.

    row = lambda n: pl.BlockSpec((TB, n), lambda i: (i, 0))
    # Constant weight/bias blocks: same block index every step, never
    # re-fetched.  (At large k, additionally single-buffer these or switch
    # conv1/convT2 to per-window matmuls — see scaling note at the top.)
    rep = lambda a: pl.BlockSpec(a.shape, lambda i: (0, 0))

    z_full, recon = pl.pallas_call(
        _cae_fused_kernel,
        out_shape=(jax.ShapeDtypeStruct((B, _Z_LANES), jnp.bfloat16),
                   jax.ShapeDtypeStruct((B, L2 * 200), jnp.bfloat16)),
        grid_spec=pltpu.PrefetchScalarGridSpec(
            num_scalar_prefetch=0,
            grid=grid,
            in_specs=[row(L1 * 20)] + [rep(a) for a in wp],
            out_specs=[row(_Z_LANES), row(L2 * 200)],
        ),
        compiler_params=pltpu.CompilerParams(
            dimension_semantics=("parallel",),          # shard row tiles across v7x's 2 TCs
            vmem_limit_bytes=48 * 1024 * 1024),         # headroom for 2048-row tiles
    )(xin, *wp)

    z = z_full[:, :25]                                  # drop the zero lane padding
    recon = recon.reshape(B, 1, L2 * 200)               # free: adds a size-1 dim
    return recon, z


# ---------------------------------------------------------------------------
# Model parameters (PyTorch shapes)
# ---------------------------------------------------------------------------
def make_params(k, key):
    L1 = (k - 20) // 20 + 1
    L2 = (L1 - 10) // 10 + 1
    F = 10 * L2
    keys = jax.random.split(key, 16)

    def u(kk, shape, fan_in):
        bound = 1.0 / math.sqrt(fan_in)
        return jax.random.uniform(kk, shape, jnp.float32, -bound, bound)

    return {
        "W1": u(keys[0], (5, 1, 20), 20),   "b1": u(keys[1], (5,), 20),
        "W2": u(keys[2], (10, 5, 10), 50),  "b2": u(keys[3], (10,), 50),
        "W3": u(keys[4], (50, F), F),       "b3": u(keys[5], (50,), F),
        "W4": u(keys[6], (25, 50), 50),     "b4": u(keys[7], (25,), 50),
        "W5": u(keys[8], (50, 25), 25),     "b5": u(keys[9], (50,), 25),
        "W6": u(keys[10], (F, 50), 50),     "b6": u(keys[11], (F,), 50),
        "Wt1": u(keys[12], (10, 5, 10), 100), "bt1": u(keys[13], (5,), 100),
        "Wt2": u(keys[14], (5, 1, 20), 100),  "bt2": u(keys[15], (1,), 100),
    }


# ---------------------------------------------------------------------------
# Pure-JAX reference (mirrors PyTorch semantics, true f32 matmuls)
# ---------------------------------------------------------------------------
def ref_forward(x, p):
    B, _, k = x.shape
    L1 = (k - 20) // 20 + 1
    L2 = (L1 - 10) // 10 + 1
    relu = lambda a: jnp.maximum(a, 0.0)

    xw = x[:, 0, :L1 * 20].reshape(B, L1, 20)
    h1 = relu(jnp.einsum("btk,ok->bot", xw, p["W1"][:, 0, :], precision=_HI)
              + p["b1"][None, :, None])                               # (B,5,L1)
    h1w = h1[:, :, :L2 * 10].reshape(B, 5, L2, 10)
    h2 = relu(jnp.einsum("bctk,ock->bot", h1w, p["W2"], precision=_HI)
              + p["b2"][None, :, None])                               # (B,10,L2)
    f = h2.reshape(B, 10 * L2)
    h3 = relu(jnp.dot(f, p["W3"].T, precision=_HI) + p["b3"])
    z = jnp.dot(h3, p["W4"].T, precision=_HI) + p["b4"]
    d1 = relu(jnp.dot(z, p["W5"].T, precision=_HI) + p["b5"])
    d2 = jnp.dot(d1, p["W6"].T, precision=_HI) + p["b6"]
    u = relu(d2.reshape(B, 10, L2))
    t1 = jnp.einsum("bct,cok->botk", u, p["Wt1"], precision=_HI).reshape(B, 5, L2 * 10)
    t1 = relu(t1 + p["bt1"][None, :, None])
    t2 = jnp.einsum("bct,cok->botk", t1, p["Wt2"], precision=_HI).reshape(B, 1, L2 * 200)
    recon = jax.nn.sigmoid(t2 + p["bt2"][None, :, None])
    return recon, z


# ---------------------------------------------------------------------------
if __name__ == "__main__":
    B, k = 2, 400  # k divisible by 200 so the decoder reconstructs full length

    x = jax.random.uniform(jax.random.PRNGKey(0), (B, 1, k), jnp.float32)
    params = make_params(k, jax.random.PRNGKey(1))
    wp = prepare_weights(params, k)            # one-time weight relayout (hoisted)

    fwd = jax.jit(c_ae_forward)
    recon, z = fwd(x, wp)
    jax.block_until_ready((recon, z))

    recon_ref, z_ref = ref_forward(x, params)

    assert recon.shape == (B, 1, k), recon.shape
    assert z.shape == (B, 25), z.shape
    # Kernel uses bf16 HBM storage (input/weights/outputs) and DEFAULT MXU
    # precision with f32 accumulation; accumulated rounding vs the f32
    # reference is ~1e-2 worst case here.
    assert jnp.allclose(z.astype(jnp.float32), z_ref, atol=3e-2, rtol=3e-2), \
        float(jnp.max(jnp.abs(z.astype(jnp.float32) - z_ref)))
    assert jnp.allclose(recon.astype(jnp.float32), recon_ref, atol=3e-2, rtol=3e-2), \
        float(jnp.max(jnp.abs(recon.astype(jnp.float32) - recon_ref)))

    print("KERNEL_OK")
</pallas_src>

<mosaic_0001>
module attributes {stable_mosaic.version = 11 : i64} {
  func.func @_cae_fused_kernel(%arg0: i32, %arg1: memref<8x400xbf16, #tpu.memory_space<vmem>>, %arg2: memref<400x100xbf16, #tpu.memory_space<vmem>>, %arg3: memref<1x100xbf16, #tpu.memory_space<vmem>>, %arg4: memref<100x20xbf16, #tpu.memory_space<vmem>>, %arg5: memref<1x20xbf16, #tpu.memory_space<vmem>>, %arg6: memref<20x50xbf16, #tpu.memory_space<vmem>>, %arg7: memref<1x50xbf16, #tpu.memory_space<vmem>>, %arg8: memref<50x128xbf16, #tpu.memory_space<vmem>>, %arg9: memref<1x128xbf16, #tpu.memory_space<vmem>>, %arg10: memref<128x50xbf16, #tpu.memory_space<vmem>>, %arg11: memref<1x50xbf16, #tpu.memory_space<vmem>>, %arg12: memref<50x20xbf16, #tpu.memory_space<vmem>>, %arg13: memref<1x20xbf16, #tpu.memory_space<vmem>>, %arg14: memref<20x100xbf16, #tpu.memory_space<vmem>>, %arg15: memref<1x100xbf16, #tpu.memory_space<vmem>>, %arg16: memref<100x400xbf16, #tpu.memory_space<vmem>>, %arg17: memref<1x400xbf16, #tpu.memory_space<vmem>>, %arg18: memref<8x128xbf16, #tpu.memory_space<vmem>>, %arg19: memref<8x400xbf16, #tpu.memory_space<vmem>>) attributes {dimension_semantics = [#tpu.dimension_semantics<parallel>], iteration_bounds = array<i64: 1>, scalar_prefetch = 0 : i64, scratch_operands = 0 : i64, tpu.core_type = #tpu.core_type<tc>, window_params = [{transform_indices = @transform_0, window_bounds = array<i64: 8, 400>}, {pipeline_mode = #tpu.pipeline_mode<synchronous>, transform_indices = @transform_1, window_bounds = array<i64: 400, 100>}, {pipeline_mode = #tpu.pipeline_mode<synchronous>, transform_indices = @transform_2, window_bounds = array<i64: 1, 100>}, {pipeline_mode = #tpu.pipeline_mode<synchronous>, transform_indices = @transform_3, window_bounds = array<i64: 100, 20>}, {pipeline_mode = #tpu.pipeline_mode<synchronous>, transform_indices = @transform_4, window_bounds = array<i64: 1, 20>}, {pipeline_mode = #tpu.pipeline_mode<synchronous>, transform_indices = @transform_5, window_bounds = array<i64: 20, 50>}, {pipeline_mode = #tpu.pipeline_mode<synchronous>, transform_indices = @transform_6, window_bounds = array<i64: 1, 50>}, {pipeline_mode = #tpu.pipeline_mode<synchronous>, transform_indices = @transform_7, window_bounds = array<i64: 50, 128>}, {pipeline_mode = #tpu.pipeline_mode<synchronous>, transform_indices = @transform_8, window_bounds = array<i64: 1, 128>}, {pipeline_mode = #tpu.pipeline_mode<synchronous>, transform_indices = @transform_9, window_bounds = array<i64: 128, 50>}, {pipeline_mode = #tpu.pipeline_mode<synchronous>, transform_indices = @transform_10, window_bounds = array<i64: 1, 50>}, {pipeline_mode = #tpu.pipeline_mode<synchronous>, transform_indices = @transform_11, window_bounds = array<i64: 50, 20>}, {pipeline_mode = #tpu.pipeline_mode<synchronous>, transform_indices = @transform_12, window_bounds = array<i64: 1, 20>}, {pipeline_mode = #tpu.pipeline_mode<synchronous>, transform_indices = @transform_13, window_bounds = array<i64: 20, 100>}, {pipeline_mode = #tpu.pipeline_mode<synchronous>, transform_indices = @transform_14, window_bounds = array<i64: 1, 100>}, {pipeline_mode = #tpu.pipeline_mode<synchronous>, transform_indices = @transform_15, window_bounds = array<i64: 100, 400>}, {pipeline_mode = #tpu.pipeline_mode<synchronous>, transform_indices = @transform_16, window_bounds = array<i64: 1, 400>}, {transform_indices = @transform_17, window_bounds = array<i64: 8, 128>}, {transform_indices = @transform_18, window_bounds = array<i64: 8, 400>}]} {
    %c0 = arith.constant 0 : index
    %c0_0 = arith.constant 0 : index
    %0 = vector.load %arg1[%c0, %c0_0] : memref<8x400xbf16, #tpu.memory_space<vmem>>, vector<8x400xbf16>
    %c0_1 = arith.constant 0 : index
    %c0_2 = arith.constant 0 : index
    %1 = vector.load %arg2[%c0_1, %c0_2] : memref<400x100xbf16, #tpu.memory_space<vmem>>, vector<400x100xbf16>
    %cst = arith.constant dense<0.000000e+00> : vector<8x100xf32>
    %2 = tpu.matmul %0, %1, %cst {dimension_numbers = #tpu.dot_dimension_numbers<[1], [0], [0], [1], [0, 0, 1, 1], [], []>} : vector<8x400xbf16>, vector<400x100xbf16>, vector<8x100xf32> -> vector<8x100xf32>
    %c0_3 = arith.constant 0 : index
    %c0_4 = arith.constant 0 : index
    %3 = vector.load %arg3[%c0_3, %c0_4] : memref<1x100xbf16, #tpu.memory_space<vmem>>, vector<1x100xbf16>
    %4 = arith.extf %3 : vector<1x100xbf16> to vector<1x100xf32>
    %5 = vector.broadcast %4 : vector<1x100xf32> to vector<8x100xf32>
    %6 = arith.addf %2, %5 : vector<8x100xf32>
    %cst_5 = arith.constant 0.000000e+00 : f32
    %7 = vector.broadcast %cst_5 : f32 to vector<8x100xf32>
    %8 = arith.maximumf %6, %7 : vector<8x100xf32>
    %c0_6 = arith.constant 0 : index
    %c0_7 = arith.constant 0 : index
    %9 = vector.load %arg4[%c0_6, %c0_7] : memref<100x20xbf16, #tpu.memory_space<vmem>>, vector<100x20xbf16>
    %cst_8 = arith.constant dense<0.000000e+00> : vector<8x20xf32>
    %10 = tpu.matmul %8, %9, %cst_8 {dimension_numbers = #tpu.dot_dimension_numbers<[1], [0], [0], [1], [0, 0, 1, 1], [], []>} : vector<8x100xf32>, vector<100x20xbf16>, vector<8x20xf32> -> vector<8x20xf32>
    %c0_9 = arith.constant 0 : index
    %c0_10 = arith.constant 0 : index
    %11 = vector.load %arg5[%c0_9, %c0_10] : memref<1x20xbf16, #tpu.memory_space<vmem>>, vector<1x20xbf16>
    %12 = arith.extf %11 : vector<1x20xbf16> to vector<1x20xf32>
    %13 = vector.broadcast %12 : vector<1x20xf32> to vector<8x20xf32>
    %14 = arith.addf %10, %13 : vector<8x20xf32>
    %cst_11 = arith.constant 0.000000e+00 : f32
    %15 = vector.broadcast %cst_11 : f32 to vector<8x20xf32>
    %16 = arith.maximumf %14, %15 : vector<8x20xf32>
    %c0_12 = arith.constant 0 : index
    %c0_13 = arith.constant 0 : index
    %17 = vector.load %arg6[%c0_12, %c0_13] : memref<20x50xbf16, #tpu.memory_space<vmem>>, vector<20x50xbf16>
    %cst_14 = arith.constant dense<0.000000e+00> : vector<8x50xf32>
    %18 = tpu.matmul %16, %17, %cst_14 {dimension_numbers = #tpu.dot_dimension_numbers<[1], [0], [0], [1], [0, 0, 1, 1], [], []>} : vector<8x20xf32>, vector<20x50xbf16>, vector<8x50xf32> -> vector<8x50xf32>
    %c0_15 = arith.constant 0 : index
    %c0_16 = arith.constant 0 : index
    %19 = vector.load %arg7[%c0_15, %c0_16] : memref<1x50xbf16, #tpu.memory_space<vmem>>, vector<1x50xbf16>
    %20 = arith.extf %19 : vector<1x50xbf16> to vector<1x50xf32>
    %21 = vector.broadcast %20 : vector<1x50xf32> to vector<8x50xf32>
    %22 = arith.addf %18, %21 : vector<8x50xf32>
    %cst_17 = arith.constant 0.000000e+00 : f32
    %23 = vector.broadcast %cst_17 : f32 to vector<8x50xf32>
    %24 = arith.maximumf %22, %23 : vector<8x50xf32>
    %c0_18 = arith.constant 0 : index
    %c0_19 = arith.constant 0 : index
    %25 = vector.load %arg8[%c0_18, %c0_19] : memref<50x128xbf16, #tpu.memory_space<vmem>>, vector<50x128xbf16>
    %cst_20 = arith.constant dense<0.000000e+00> : vector<8x128xf32>
    %26 = tpu.matmul %24, %25, %cst_20 {dimension_numbers = #tpu.dot_dimension_numbers<[1], [0], [0], [1], [0, 0, 1, 1], [], []>} : vector<8x50xf32>, vector<50x128xbf16>, vector<8x128xf32> -> vector<8x128xf32>
    %c0_21 = arith.constant 0 : index
    %c0_22 = arith.constant 0 : index
    %27 = vector.load %arg9[%c0_21, %c0_22] : memref<1x128xbf16, #tpu.memory_space<vmem>>, vector<1x128xbf16>
    %28 = arith.extf %27 : vector<1x128xbf16> to vector<1x128xf32>
    %29 = vector.broadcast %28 : vector<1x128xf32> to vector<8x128xf32>
    %30 = arith.addf %26, %29 : vector<8x128xf32>
    %31 = arith.truncf %30 : vector<8x128xf32> to vector<8x128xbf16>
    %c0_23 = arith.constant 0 : index
    %c0_24 = arith.constant 0 : index
    %32 = vector.load %arg18[%c0_23, %c0_24] : memref<8x128xbf16, #tpu.memory_space<vmem>>, vector<8x128xbf16>
    tpu.vector_store %arg18[%c0_23, %c0_24], %31 {strides = array<i32>} : memref<8x128xbf16, #tpu.memory_space<vmem>>, vector<8x128xbf16>,
    %c0_25 = arith.constant 0 : index
    %c0_26 = arith.constant 0 : index
    %33 = vector.load %arg10[%c0_25, %c0_26] : memref<128x50xbf16, #tpu.memory_space<vmem>>, vector<128x50xbf16>
    %cst_27 = arith.constant dense<0.000000e+00> : vector<8x50xf32>
    %34 = tpu.matmul %30, %33, %cst_27 {dimension_numbers = #tpu.dot_dimension_numbers<[1], [0], [0], [1], [0, 0, 1, 1], [], []>} : vector<8x128xf32>, vector<128x50xbf16>, vector<8x50xf32> -> vector<8x50xf32>
    %c0_28 = arith.constant 0 : index
    %c0_29 = arith.constant 0 : index
    %35 = vector.load %arg11[%c0_28, %c0_29] : memref<1x50xbf16, #tpu.memory_space<vmem>>, vector<1x50xbf16>
    %36 = arith.extf %35 : vector<1x50xbf16> to vector<1x50xf32>
    %37 = vector.broadcast %36 : vector<1x50xf32> to vector<8x50xf32>
    %38 = arith.addf %34, %37 : vector<8x50xf32>
    %cst_30 = arith.constant 0.000000e+00 : f32
    %39 = vector.broadcast %cst_30 : f32 to vector<8x50xf32>
    %40 = arith.maximumf %38, %39 : vector<8x50xf32>
    %c0_31 = arith.constant 0 : index
    %c0_32 = arith.constant 0 : index
    %41 = vector.load %arg12[%c0_31, %c0_32] : memref<50x20xbf16, #tpu.memory_space<vmem>>, vector<50x20xbf16>
    %cst_33 = arith.constant dense<0.000000e+00> : vector<8x20xf32>
    %42 = tpu.matmul %40, %41, %cst_33 {dimension_numbers = #tpu.dot_dimension_numbers<[1], [0], [0], [1], [0, 0, 1, 1], [], []>} : vector<8x50xf32>, vector<50x20xbf16>, vector<8x20xf32> -> vector<8x20xf32>
    %c0_34 = arith.constant 0 : index
    %c0_35 = arith.constant 0 : index
    %43 = vector.load %arg13[%c0_34, %c0_35] : memref<1x20xbf16, #tpu.memory_space<vmem>>, vector<1x20xbf16>
    %44 = arith.extf %43 : vector<1x20xbf16> to vector<1x20xf32>
    %45 = vector.broadcast %44 : vector<1x20xf32> to vector<8x20xf32>
    %46 = arith.addf %42, %45 : vector<8x20xf32>
    %cst_36 = arith.constant 0.000000e+00 : f32
    %47 = vector.broadcast %cst_36 : f32 to vector<8x20xf32>
    %48 = arith.maximumf %46, %47 : vector<8x20xf32>
    %c0_37 = arith.constant 0 : index
    %c0_38 = arith.constant 0 : index
    %49 = vector.load %arg14[%c0_37, %c0_38] : memref<20x100xbf16, #tpu.memory_space<vmem>>, vector<20x100xbf16>
    %cst_39 = arith.constant dense<0.000000e+00> : vector<8x100xf32>
    %50 = tpu.matmul %48, %49, %cst_39 {dimension_numbers = #tpu.dot_dimension_numbers<[1], [0], [0], [1], [0, 0, 1, 1], [], []>} : vector<8x20xf32>, vector<20x100xbf16>, vector<8x100xf32> -> vector<8x100xf32>
    %c0_40 = arith.constant 0 : index
    %c0_41 = arith.constant 0 : index
    %51 = vector.load %arg15[%c0_40, %c0_41] : memref<1x100xbf16, #tpu.memory_space<vmem>>, vector<1x100xbf16>
    %52 = arith.extf %51 : vector<1x100xbf16> to vector<1x100xf32>
    %53 = vector.broadcast %52 : vector<1x100xf32> to vector<8x100xf32>
    %54 = arith.addf %50, %53 : vector<8x100xf32>
    %cst_42 = arith.constant 0.000000e+00 : f32
    %55 = vector.broadcast %cst_42 : f32 to vector<8x100xf32>
    %56 = arith.maximumf %54, %55 : vector<8x100xf32>
    %c0_43 = arith.constant 0 : index
    %c0_44 = arith.constant 0 : index
    %57 = vector.load %arg16[%c0_43, %c0_44] : memref<100x400xbf16, #tpu.memory_space<vmem>>, vector<100x400xbf16>
    %cst_45 = arith.constant dense<0.000000e+00> : vector<8x400xf32>
    %58 = tpu.matmul %56, %57, %cst_45 {dimension_numbers = #tpu.dot_dimension_numbers<[1], [0], [0], [1], [0, 0, 1, 1], [], []>} : vector<8x100xf32>, vector<100x400xbf16>, vector<8x400xf32> -> vector<8x400xf32>
    %c0_46 = arith.constant 0 : index
    %c0_47 = arith.constant 0 : index
    %59 = vector.load %arg17[%c0_46, %c0_47] : memref<1x400xbf16, #tpu.memory_space<vmem>>, vector<1x400xbf16>
    %60 = arith.extf %59 : vector<1x400xbf16> to vector<1x400xf32>
    %61 = vector.broadcast %60 : vector<1x400xf32> to vector<8x400xf32>
    %62 = arith.addf %58, %61 : vector<8x400xf32>
    %63 = arith.negf %62 : vector<8x400xf32>
    %64 = math.exp %63 : vector<8x400xf32>
    %cst_48 = arith.constant 1.000000e+00 : f32
    %65 = vector.broadcast %cst_48 : f32 to vector<8x400xf32>
    %66 = arith.addf %65, %64 : vector<8x400xf32>
    %67 = arith.divf %65, %66 : vector<8x400xf32>
    %68 = arith.truncf %67 : vector<8x400xf32> to vector<8x400xbf16>
    %c0_49 = arith.constant 0 : index
    %c0_50 = arith.constant 0 : index
    %69 = vector.load %arg19[%c0_49, %c0_50] : memref<8x400xbf16, #tpu.memory_space<vmem>>, vector<8x400xbf16>
    tpu.vector_store %arg19[%c0_49, %c0_50], %68 {strides = array<i32>} : memref<8x400xbf16, #tpu.memory_space<vmem>>, vector<8x400xbf16>,
    return
  }
  func.func @transform_0(%arg0: i32) -> (i32, i32) {
    %c0_i32 = arith.constant 0 : i32
    %c0_i32_0 = arith.constant 0 : i32
    return %arg0, %c0_i32 : i32, i32
  }
  func.func @transform_1(%arg0: i32) -> (i32, i32) {
    %c0_i32 = arith.constant 0 : i32
    %c0_i32_0 = arith.constant 0 : i32
    %c0_i32_1 = arith.constant 0 : i32
    return %c0_i32, %c0_i32_0 : i32, i32
  }
  func.func @transform_2(%arg0: i32) -> (i32, i32) {
    %c0_i32 = arith.constant 0 : i32
    %c0_i32_0 = arith.constant 0 : i32
    %c0_i32_1 = arith.constant 0 : i32
    return %c0_i32, %c0_i32_0 : i32, i32
  }
  func.func @transform_3(%arg0: i32) -> (i32, i32) {
    %c0_i32 = arith.constant 0 : i32
    %c0_i32_0 = arith.constant 0 : i32
    %c0_i32_1 = arith.constant 0 : i32
    return %c0_i32, %c0_i32_0 : i32, i32
  }
  func.func @transform_4(%arg0: i32) -> (i32, i32) {
    %c0_i32 = arith.constant 0 : i32
    %c0_i32_0 = arith.constant 0 : i32
    %c0_i32_1 = arith.constant 0 : i32
    return %c0_i32, %c0_i32_0 : i32, i32
  }
  func.func @transform_5(%arg0: i32) -> (i32, i32) {
    %c0_i32 = arith.constant 0 : i32
    %c0_i32_0 = arith.constant 0 : i32
    %c0_i32_1 = arith.constant 0 : i32
    return %c0_i32, %c0_i32_0 : i32, i32
  }
  func.func @transform_6(%arg0: i32) -> (i32, i32) {
    %c0_i32 = arith.constant 0 : i32
    %c0_i32_0 = arith.constant 0 : i32
    %c0_i32_1 = arith.constant 0 : i32
    return %c0_i32, %c0_i32_0 : i32, i32
  }
  func.func @transform_7(%arg0: i32) -> (i32, i32) {
    %c0_i32 = arith.constant 0 : i32
    %c0_i32_0 = arith.constant 0 : i32
    %c0_i32_1 = arith.constant 0 : i32
    return %c0_i32, %c0_i32_0 : i32, i32
  }
  func.func @transform_8(%arg0: i32) -> (i32, i32) {
    %c0_i32 = arith.constant 0 : i32
    %c0_i32_0 = arith.constant 0 : i32
    %c0_i32_1 = arith.constant 0 : i32
    return %c0_i32, %c0_i32_0 : i32, i32
  }
  func.func @transform_9(%arg0: i32) -> (i32, i32) {
    %c0_i32 = arith.constant 0 : i32
    %c0_i32_0 = arith.constant 0 : i32
    %c0_i32_1 = arith.constant 0 : i32
    return %c0_i32, %c0_i32_0 : i32, i32
  }
  func.func @transform_10(%arg0: i32) -> (i32, i32) {
    %c0_i32 = arith.constant 0 : i32
    %c0_i32_0 = arith.constant 0 : i32
    %c0_i32_1 = arith.constant 0 : i32
    return %c0_i32, %c0_i32_0 : i32, i32
  }
  func.func @transform_11(%arg0: i32) -> (i32, i32) {
    %c0_i32 = arith.constant 0 : i32
    %c0_i32_0 = arith.constant 0 : i32
    %c0_i32_1 = arith.constant 0 : i32
    return %c0_i32, %c0_i32_0 : i32, i32
  }
  func.func @transform_12(%arg0: i32) -> (i32, i32) {
    %c0_i32 = arith.constant 0 : i32
    %c0_i32_0 = arith.constant 0 : i32
    %c0_i32_1 = arith.constant 0 : i32
    return %c0_i32, %c0_i32_0 : i32, i32
  }
  func.func @transform_13(%arg0: i32) -> (i32, i32) {
    %c0_i32 = arith.constant 0 : i32
    %c0_i32_0 = arith.constant 0 : i32
    %c0_i32_1 = arith.constant 0 : i32
    return %c0_i32, %c0_i32_0 : i32, i32
  }
  func.func @transform_14(%arg0: i32) -> (i32, i32) {
    %c0_i32 = arith.constant 0 : i32
    %c0_i32_0 = arith.constant 0 : i32
    %c0_i32_1 = arith.constant 0 : i32
    return %c0_i32, %c0_i32_0 : i32, i32
  }
  func.func @transform_15(%arg0: i32) -> (i32, i32) {
    %c0_i32 = arith.constant 0 : i32
    %c0_i32_0 = arith.constant 0 : i32
    %c0_i32_1 = arith.constant 0 : i32
    return %c0_i32, %c0_i32_0 : i32, i32
  }
  func.func @transform_16(%arg0: i32) -> (i32, i32) {
    %c0_i32 = arith.constant 0 : i32
    %c0_i32_0 = arith.constant 0 : i32
    %c0_i32_1 = arith.constant 0 : i32
    return %c0_i32, %c0_i32_0 : i32, i32
  }
  func.func @transform_17(%arg0: i32) -> (i32, i32) {
    %c0_i32 = arith.constant 0 : i32
    %c0_i32_0 = arith.constant 0 : i32
    return %arg0, %c0_i32 : i32, i32
  }
  func.func @transform_18(%arg0: i32) -> (i32, i32) {
    %c0_i32 = arith.constant 0 : i32
    %c0_i32_0 = arith.constant 0 : i32
    return %arg0, %c0_i32 : i32, i32
  }
}

</mosaic_0001>

<llo_original>
// kernel: c_ae_forward.1
$region0: #{c_ae_forward.1}
  #allocation0 [shape = 'u32[]', space=smem, size = 0x4, offset = 0x4, fixed_abs, tag = 'smem constant byte address 0x4 - core index']
  #allocation1 [shape = 'u32[144,128]{1,0:T(1,128)}', space=vmem, size = 0x12000, scoped, tag = 'internal scratch']
  %s0 = inlined_call_operand.vmem [shape: bf16[2,400], index: 0, kind: input, shape index: {}]
  %s1 = inlined_call_operand.vmem [shape: bf16[400,100], index: 1, kind: input, shape index: {}]
  %s2 = inlined_call_operand.vmem [shape: bf16[1,100], index: 2, kind: input, shape index: {}]
  %s3 = inlined_call_operand.vmem [shape: bf16[100,20], index: 3, kind: input, shape index: {}]
  %s4 = inlined_call_operand.vmem [shape: bf16[1,20], index: 4, kind: input, shape index: {}]
  %s5 = inlined_call_operand.vmem [shape: bf16[20,50], index: 5, kind: input, shape index: {}]
  %s6 = inlined_call_operand.vmem [shape: bf16[1,50], index: 6, kind: input, shape index: {}]
  %s7 = inlined_call_operand.vmem [shape: bf16[50,128], index: 7, kind: input, shape index: {}]
  %s8 = inlined_call_operand.vmem [shape: bf16[1,128], index: 8, kind: input, shape index: {}]
  %s9 = inlined_call_operand.vmem [shape: bf16[128,50], index: 9, kind: input, shape index: {}]
  %s10 = inlined_call_operand.vmem [shape: bf16[1,50], index: 10, kind: input, shape index: {}]
  %s11 = inlined_call_operand.vmem [shape: bf16[50,20], index: 11, kind: input, shape index: {}]
  %s12 = inlined_call_operand.vmem [shape: bf16[1,20], index: 12, kind: input, shape index: {}]
  %s13 = inlined_call_operand.vmem [shape: bf16[20,100], index: 13, kind: input, shape index: {}]
  %s14 = inlined_call_operand.vmem [shape: bf16[1,100], index: 14, kind: input, shape index: {}]
  %s15 = inlined_call_operand.vmem [shape: bf16[100,400], index: 15, kind: input, shape index: {}]
  %s16 = inlined_call_operand.vmem [shape: bf16[1,400], index: 16, kind: input, shape index: {}]
  %s17 = inlined_call_operand.hbm [shape: bf16[2,128], index: 17, kind: output, shape index: {0}]
  %s18 = inlined_call_operand.hbm [shape: bf16[2,400], index: 18, kind: output, shape index: {1}]
  %19 = xla_tuple %s17, %s18
  %s20 = sld [smem:[#allocation0]]
  $region86: #{c_ae_forward.1} parent=0
    _
  %s22 = ssub.s32 1, %s20
  %s23 = scalar_select 0, %s22, %s20
  $region1: #{c_ae_forward.1} parent=0
    #allocation2 [shape = 'u8[2048]{0}', space=vmem, size = 0x800, scoped, tag = 'output window, operand 0, single buffered']
    #allocation3 [shape = 's32[1]{0}', space=sflag, size = 0x4, scoped, tag = 'scoped memory for c_ae_forward.1']
    #allocation4 [shape = 'u8[8192]{0}', space=vmem, size = 0x2000, scoped, tag = 'output window, operand 1, single buffered']
    #allocation5 [shape = 's32[1]{0}', space=sflag, size = 0x4, scoped, tag = 'scoped memory for c_ae_forward.1']
    %24 = vsyncpa [#allocation3], 0
    %25 = vsyncpa [#allocation5], 0
    // Predicated region
    $region2: #{c_ae_forward.1} parent=1 // pred_check
      _
    $region3: #{c_ae_forward.1} parent=1 // pred_check_branch
      %27 = sbr.rel (0) target = $region5
    $region4: #{c_ae_forward.1} parent=1 // pred_region
      _
    $region5: #{c_ae_forward.1} parent=1 // pred_fallthru
      _
    // Predicated region
    $region6: #{c_ae_forward.1} parent=1 // pred_check
      _
    $region7: #{c_ae_forward.1} parent=1 // pred_check_branch
      %29 = sbr.rel (0) target = $region9
    $region8: #{c_ae_forward.1} parent=1 // pred_region
      _
    $region9: #{c_ae_forward.1} parent=1 // pred_fallthru
      _
    // Predicated region
    $region10: #{c_ae_forward.1} parent=1 // pred_check
      _
    $region11: #{c_ae_forward.1} parent=1 // pred_check_branch
      %31 = sbr.rel (0) target = $region13
    $region12: #{c_ae_forward.1} parent=1 // pred_region
      _
    $region13: #{c_ae_forward.1} parent=1 // pred_fallthru
      _
    // Predicated region
    $region14: #{c_ae_forward.1} parent=1 // pred_check
      _
    $region15: #{c_ae_forward.1} parent=1 // pred_check_branch
      %33 = sbr.rel (0) target = $region17
    $region16: #{c_ae_forward.1} parent=1 // pred_region
      _
    $region17: #{c_ae_forward.1} parent=1 // pred_fallthru
      _
    // Predicated region
    $region18: #{c_ae_forward.1} parent=1 // pred_check
      _
    $region19: #{c_ae_forward.1} parent=1 // pred_check_branch
      %35 = sbr.rel (0) target = $region21
    $region20: #{c_ae_forward.1} parent=1 // pred_region
      _
    $region21: #{c_ae_forward.1} parent=1 // pred_fallthru
      _
    // Predicated region
    $region22: #{c_ae_forward.1} parent=1 // pred_check
      _
    $region23: #{c_ae_forward.1} parent=1 // pred_check_branch
      %37 = sbr.rel (0) target = $region25
    $region24: #{c_ae_forward.1} parent=1 // pred_region
      _
    $region25: #{c_ae_forward.1} parent=1 // pred_fallthru
      _
    // Predicated region
    $region26: #{c_ae_forward.1} parent=1 // pred_check
      _
    $region27: #{c_ae_forward.1} parent=1 // pred_check_branch
      %39 = sbr.rel (0) target = $region29
    $region28: #{c_ae_forward.1} parent=1 // pred_region
      _
    $region29: #{c_ae_forward.1} parent=1 // pred_fallthru
      _
    // Predicated region
    $region30: #{c_ae_forward.1} parent=1 // pred_check
      _
    $region31: #{c_ae_forward.1} parent=1 // pred_check_branch
      %41 = sbr.rel (0) target = $region33
    $region32: #{c_ae_forward.1} parent=1 // pred_region
      _
    $region33: #{c_ae_forward.1} parent=1 // pred_fallthru
      _
    // Predicated region
    $region34: #{c_ae_forward.1} parent=1 // pred_check
      _
    $region35: #{c_ae_forward.1} parent=1 // pred_check_branch
      %43 = sbr.rel (0) target = $region37
    $region36: #{c_ae_forward.1} parent=1 // pred_region
      _
    $region37: #{c_ae_forward.1} parent=1 // pred_fallthru
      _
    // Predicated region
    $region38: #{c_ae_forward.1} parent=1 // pred_check
      _
    $region39: #{c_ae_forward.1} parent=1 // pred_check_branch
      %45 = sbr.rel (0) target = $region41
    $region40: #{c_ae_forward.1} parent=1 // pred_region
      _
    $region41: #{c_ae_forward.1} parent=1 // pred_fallthru
      _
    // Predicated region
    $region42: #{c_ae_forward.1} parent=1 // pred_check
      _
    $region43: #{c_ae_forward.1} parent=1 // pred_check_branch
      %47 = sbr.rel (0) target = $region45
    $region44: #{c_ae_forward.1} parent=1 // pred_region
      _
    $region45: #{c_ae_forward.1} parent=1 // pred_fallthru
      _
    // Predicated region
    $region46: #{c_ae_forward.1} parent=1 // pred_check
      _
    $region47: #{c_ae_forward.1} parent=1 // pred_check_branch
      %49 = sbr.rel (0) target = $region49
    $region48: #{c_ae_forward.1} parent=1 // pred_region
      _
    $region49: #{c_ae_forward.1} parent=1 // pred_fallthru
      _
    // Predicated region
    $region50: #{c_ae_forward.1} parent=1 // pred_check
      _
    $region51: #{c_ae_forward.1} parent=1 // pred_check_branch
      %51 = sbr.rel (0) target = $region53
    $region52: #{c_ae_forward.1} parent=1 // pred_region
      _
    $region53: #{c_ae_forward.1} parent=1 // pred_fallthru
      _
    // Predicated region
    $region54: #{c_ae_forward.1} parent=1 // pred_check
      _
    $region55: #{c_ae_forward.1} parent=1 // pred_check_branch
      %53 = sbr.rel (0) target = $region57
    $region56: #{c_ae_forward.1} parent=1 // pred_region
      _
    $region57: #{c_ae_forward.1} parent=1 // pred_fallthru
      _
    // Predicated region
    $region58: #{c_ae_forward.1} parent=1 // pred_check
      _
    $region59: #{c_ae_forward.1} parent=1 // pred_check_branch
      %55 = sbr.rel (0) target = $region61
    $region60: #{c_ae_forward.1} parent=1 // pred_region
      _
    $region61: #{c_ae_forward.1} parent=1 // pred_fallthru
      _
    // Predicated region
    $region62: #{c_ae_forward.1} parent=1 // pred_check
      _
    $region63: #{c_ae_forward.1} parent=1 // pred_check_branch
      %57 = sbr.rel (0) target = $region65
    $region64: #{c_ae_forward.1} parent=1 // pred_region
      _
    $region65: #{c_ae_forward.1} parent=1 // pred_fallthru
      _
    // Predicated region
    $region66: #{c_ae_forward.1} parent=1 // pred_check
      _
    $region67: #{c_ae_forward.1} parent=1 // pred_check_branch
      %59 = sbr.rel (0) target = $region69
    $region68: #{c_ae_forward.1} parent=1 // pred_region
      _
    $region69: #{c_ae_forward.1} parent=1 // pred_fallthru
      _
    %v61 = vld [vmem:[%s0] sm:$0xf]
    %v62 = vld [vmem:[%s0 + $0x4] sm:$0xf]
    %v63 = vld [vmem:[%s0 + $0x8] sm:$0xf]
    %v64 = vld [vmem:[%s0 + $0xc] sm:$0xf]
    %v65 = vld [vmem:[%s1] sm:$0xf]
    %v66 = vld [vmem:[%s1 + $0x4] sm:$0xf]
    %v67 = vld [vmem:[%s1 + $0x8] sm:$0xf]
    %v68 = vld [vmem:[%s1 + $0xc] sm:$0xf]
    %v69 = vld [vmem:[%s1 + $0x10] sm:$0xf]
    %v70 = vld [vmem:[%s1 + $0x14] sm:$0xf]
    %v71 = vld [vmem:[%s1 + $0x18] sm:$0xf]
    %v72 = vld [vmem:[%s1 + $0x1c] sm:$0xf]
    %v73 = vld [vmem:[%s1 + $0x20] sm:$0xf]
    %v74 = vld [vmem:[%s1 + $0x24] sm:$0xf]
    %v75 = vld [vmem:[%s1 + $0x28] sm:$0xf]
    %v76 = vld [vmem:[%s1 + $0x2c] sm:$0xf]
    %v77 = vld [vmem:[%s1 + $0x30] sm:$0xf]
    %v78 = vld [vmem:[%s1 + $0x34] sm:$0xf]
    %v79 = vld [vmem:[%s1 + $0x38] sm:$0xf]
    %v80 = vld [vmem:[%s1 + $0x3c] sm:$0xf]
    %v81 = vld [vmem:[%s1 + $0x40] sm:$0xf]
    %v82 = vld [vmem:[%s1 + $0x44] sm:$0xf]
    %v83 = vld [vmem:[%s1 + $0x48] sm:$0xf]
    %v84 = vld [vmem:[%s1 + $0x4c] sm:$0xf]
    %v85 = vld [vmem:[%s1 + $0x50] sm:$0xf]
    %v86 = vld [vmem:[%s1 + $0x54] sm:$0xf]
    %v87 = vld [vmem:[%s1 + $0x58] sm:$0xf]
    %v88 = vld [vmem:[%s1 + $0x5c] sm:$0xf]
    %v89 = vld [vmem:[%s1 + $0x60] sm:$0xf]
    %v90 = vld [vmem:[%s1 + $0x64] sm:$0xf]
    %v91 = vld [vmem:[%s1 + $0x68] sm:$0xf]
    %v92 = vld [vmem:[%s1 + $0x6c] sm:$0xf]
    %v93 = vld [vmem:[%s1 + $0x70] sm:$0xf]
    %v94 = vld [vmem:[%s1 + $0x74] sm:$0xf]
    %v95 = vld [vmem:[%s1 + $0x78] sm:$0xf]
    %v96 = vld [vmem:[%s1 + $0x7c] sm:$0xf]
    %v97 = vld [vmem:[%s1 + $0x80] sm:$0xf]
    %v98 = vld [vmem:[%s1 + $0x84] sm:$0xf]
    %v99 = vld [vmem:[%s1 + $0x88] sm:$0xf]
    %v100 = vld [vmem:[%s1 + $0x8c] sm:$0xf]
    %v101 = vld [vmem:[%s1 + $0x90] sm:$0xf]
    %v102 = vld [vmem:[%s1 + $0x94] sm:$0xf]
    %v103 = vld [vmem:[%s1 + $0x98] sm:$0xf]
    %v104 = vld [vmem:[%s1 + $0x9c] sm:$0xf]
    %v105 = vld [vmem:[%s1 + $0xa0] sm:$0xf]
    %v106 = vld [vmem:[%s1 + $0xa4] sm:$0xf]
    %v107 = vld [vmem:[%s1 + $0xa8] sm:$0xf]
    %v108 = vld [vmem:[%s1 + $0xac] sm:$0xf]
    %v109 = vld [vmem:[%s1 + $0xb0] sm:$0xf]
    %v110 = vld [vmem:[%s1 + $0xb4] sm:$0xf]
    %v111 = vld [vmem:[%s1 + $0xb8] sm:$0xf]
    %v112 = vld [vmem:[%s1 + $0xbc] sm:$0xf]
    %v113 = vld [vmem:[%s1 + $0xc0] sm:$0xf]
    %v114 = vld [vmem:[%s1 + $0xc4] sm:$0xf]
    %v115 = vld [vmem:[%s2] sm:$0x1]
    %v116 = vunpack.c.l.bf16 %v115
    %v117 = vlaneseq
    %v118 = vshrl.u32 %v117, 7
    %v119 = vsub.s32 0, %v118
    %v120 = vrot.slane %v116, %v119
    %v125 = vcombine.low %v61, %v62
    %v126 = vcombine.low %v63, %v64
    %v128 = vunpack.c.l.s4 1966171168
    %v129 = vunpack.c.0.s8 %v128
    %v130 = vlaneseq
    %v131 = vshrl.u32 %v130, 7
    %v132 = vsub.s32 %v129, %v131
    %v133 = vrot.slane %v125, %v132
    %v135 = vunpack.c.l.s4 1966171168
    %v136 = vunpack.c.0.s8 %v135
    %v137 = vlaneseq
    %v138 = vshrl.u32 %v137, 7
    %v139 = vsub.s32 %v136, %v138
    %v140 = vrot.slane %v126, %v139
    %v141 = vcombine.low %v133, %v140
    %v142 = vcombine.high %v133, %v140
    %v144 = vunpack.c.l.s4 1966171168
    %v145 = vunpack.c.0.s8 %v144
    %v146 = vlaneseq
    %v147 = vshrl.u32 %v146, 7
    %v148 = vsub.s32 %v145, %v147
    %v149 = vrot.slane %v141, %v148
    %v151 = vunpack.c.l.s4 1966171168
    %v152 = vunpack.c.0.s8 %v151
    %v153 = vlaneseq
    %v154 = vshrl.u32 %v153, 7
    %v155 = vsub.s32 %v152, %v154
    %v156 = vrot.slane %v142, %v155
    %v157 = vcombine.high %v149, %v149
    %v158 = vcombine.high %v156, %v156
    %v212 = vunpack.c.l.b16 %v65
    %v213 = vunpack.c.l.b16 %v66
    %v214 = vunpack.c.l.b16 %v67
    %v215 = vunpack.c.l.b16 %v68
    %v216 = vunpack.c.l.b16 %v69
    %v217 = vunpack.c.l.b16 %v70
    %v218 = vunpack.c.l.b16 %v71
    %v219 = vunpack.c.l.b16 %v72
    %v220 = vunpack.c.l.b16 %v73
    %v221 = vunpack.c.l.b16 %v74
    %v222 = vunpack.c.l.b16 %v75
    %v223 = vunpack.c.l.b16 %v76
    %v224 = vunpack.c.l.b16 %v77
    %v225 = vunpack.c.l.b16 %v78
    %v226 = vunpack.c.l.b16 %v79
    %v227 = vunpack.c.l.b16 %v80
    %v228 = vunpack.c.l.b16 %v81
    %v229 = vunpack.c.l.b16 %v82
    %v230 = vunpack.c.l.b16 %v83
    %v231 = vunpack.c.l.b16 %v84
    %v232 = vunpack.c.l.b16 %v85
    %v233 = vunpack.c.l.b16 %v86
    %v234 = vunpack.c.l.b16 %v87
    %v235 = vunpack.c.l.b16 %v88
    %v236 = vunpack.c.l.b16 %v89
    %v237 = vunpack.c.l.b16 %v90
    %v238 = vunpack.c.l.b16 %v91
    %v239 = vunpack.c.l.b16 %v92
    %v240 = vunpack.c.l.b16 %v93
    %v241 = vunpack.c.l.b16 %v94
    %v242 = vunpack.c.l.b16 %v95
    %v243 = vunpack.c.l.b16 %v96
    %v244 = vunpack.c.l.b16 %v97
    %v245 = vunpack.c.l.b16 %v98
    %v246 = vunpack.c.l.b16 %v99
    %v247 = vunpack.c.l.b16 %v100
    %v248 = vunpack.c.l.b16 %v101
    %v249 = vunpack.c.l.b16 %v102
    %v250 = vunpack.c.l.b16 %v103
    %v251 = vunpack.c.l.b16 %v104
    %v252 = vunpack.c.l.b16 %v105
    %v253 = vunpack.c.l.b16 %v106
    %v254 = vunpack.c.l.b16 %v107
    %v255 = vunpack.c.l.b16 %v108
    %v256 = vunpack.c.l.b16 %v109
    %v257 = vunpack.c.l.b16 %v110
    %v258 = vunpack.c.l.b16 %v111
    %v259 = vunpack.c.l.b16 %v112
    %v260 = vunpack.c.l.b16 %v113
    %v261 = vunpack.c.l.b16 %v114
    %v262 = vpack.c.b16 %v213, %v212
    %v263 = vpack.c.b16 %v215, %v214
    %v264 = vpack.c.b16 %v217, %v216
    %v265 = vpack.c.b16 %v219, %v218
    %v266 = vpack.c.b16 %v221, %v220
    %v267 = vpack.c.b16 %v223, %v222
    %v268 = vpack.c.b16 %v225, %v224
    %v269 = vpack.c.b16 %v227, %v226
    %v270 = vpack.c.b16 %v229, %v228
    %v271 = vpack.c.b16 %v231, %v230
    %v272 = vpack.c.b16 %v233, %v232
    %v273 = vpack.c.b16 %v235, %v234
    %v274 = vpack.c.b16 %v237, %v236
    %v275 = vpack.c.b16 %v239, %v238
    %v276 = vpack.c.b16 %v241, %v240
    %v277 = vpack.c.b16 %v243, %v242
    %v278 = vpack.c.b16 %v245, %v244
    %v279 = vpack.c.b16 %v247, %v246
    %v280 = vpack.c.b16 %v249, %v248
    %v281 = vpack.c.b16 %v251, %v250
    %v282 = vpack.c.b16 %v253, %v252
    %v283 = vpack.c.b16 %v255, %v254
    %v284 = vpack.c.b16 %v257, %v256
    %v285 = vpack.c.b16 %v259, %v258
    %v286 = vpack.c.b16 %v261, %v260
    %vm312 = vcmask 130048
    %v314 = vsel %vm312, %v158, 0
    %316 = vmatprep.subr.bf16.mxu0 0
    %317 = vmatpush1.bf16.msra.mxu0 %v262
    %318 = vmatprep.subr.bf16.mxu0 0
    %319 = vmatpush1.bf16.msra.mxu0 %v263
    %320 = vmatprep.subr.bf16.mxu0 0
    %321 = vmatpush1.bf16.msra.mxu0 %v264
    %322 = vmatprep.subr.bf16.mxu0 0
    %323 = vmatpush1.bf16.msra.mxu0 %v265
    %324 = vmatprep.subr.bf16.mxu0 0
    %325 = vmatpush1.bf16.msra.mxu0 %v266
    %326 = vmatprep.subr.bf16.mxu0 0
    %327 = vmatpush1.bf16.msra.mxu0 %v267
    %328 = vmatprep.subr.bf16.mxu0 0
    %329 = vmatpush1.bf16.msra.mxu0 %v268
    %330 = vmatprep.subr.bf16.mxu0 0
    %331 = vmatpush1.bf16.msra.mxu0 %v269
    %332 = vmatprep.subr.bf16.mxu0 0
    %333 = vmatpush1.bf16.msra.mxu0 %v270
    %334 = vmatprep.subr.bf16.mxu0 0
    %335 = vmatpush1.bf16.msra.mxu0 %v271
    %336 = vmatprep.subr.bf16.mxu0 0
    %337 = vmatpush1.bf16.msra.mxu0 %v272
    %338 = vmatprep.subr.bf16.mxu0 0
    %339 = vmatpush1.bf16.msra.mxu0 %v273
    %340 = vmatprep.subr.bf16.mxu0 0
    %341 = vmatpush1.bf16.msra.mxu0 %v274
    %342 = vmatprep.subr.bf16.mxu0 0
    %343 = vmatpush1.bf16.msra.mxu0 %v275
    %344 = vmatprep.subr.bf16.mxu0 0
    %345 = vmatpush1.bf16.msra.mxu0 %v276
    %346 = vmatprep.subr.bf16.mxu0 0
    %347 = vmatpush1.bf16.msra.mxu0 %v277
    %348 = vmatprep.mubr.bf16.mxu0 %v156
    %349 = vmatmul.mubr.bf16.gmra.mrb[0].mxu0 %v149
    %v350 = vpop.f32.mrb[0].mxu0
    %v351 = vadd.f32 %v120, %v350
    %v352 = vpop.f32.mrb[0].mxu0
    %v353 = vpop.f32.mrb[0].mxu0
    %v354 = vpop.f32.mrb[0].mxu0
    %355 = vdwg.mxu0
    %356 = vmatprep.subr.bf16.mxu0 0
    %357 = vmatpush1.bf16.msra.mxu0 %v278
    %358 = vmatprep.subr.bf16.mxu0 0
    %359 = vmatpush1.bf16.msra.mxu0 %v279
    %360 = vmatprep.subr.bf16.mxu0 0
    %361 = vmatpush1.bf16.msra.mxu0 %v280
    %362 = vmatprep.subr.bf16.mxu0 0
    %363 = vmatpush1.bf16.msra.mxu0 %v281
    %364 = vmatprep.subr.bf16.mxu0 0
    %365 = vmatpush1.bf16.msra.mxu0 %v282
    %366 = vmatprep.subr.bf16.mxu0 0
    %367 = vmatpush1.bf16.msra.mxu0 %v283
    %368 = vmatprep.subr.bf16.mxu0 0
    %369 = vmatpush1.bf16.msra.mxu0 %v284
    %370 = vmatprep.subr.bf16.mxu0 0
    %371 = vmatpush1.bf16.msra.mxu0 %v285
    %372 = vmatprep.subr.bf16.mxu0 0
    %373 = vmatpush1.bf16.msra.mxu0 %v286
    %374 = vmatprep.subr.bf16.mxu0 0
    %375 = vmatpush1.bf16.msra.mxu0 0
    %376 = vmatprep.subr.bf16.mxu0 0
    %377 = vmatpush1.bf16.msra.mxu0 0
    %378 = vmatprep.subr.bf16.mxu0 0
    %379 = vmatpush1.bf16.msra.mxu0 0
    %380 = vmatprep.subr.bf16.mxu0 0
    %381 = vmatpush1.bf16.msra.mxu0 0
    %382 = vmatprep.subr.bf16.mxu0 0
    %383 = vmatpush1.bf16.msra.mxu0 0
    %384 = vmatprep.subr.bf16.mxu0 0
    %385 = vmatpush1.bf16.msra.mxu0 0
    %386 = vmatprep.subr.bf16.mxu0 0
    %387 = vmatpush1.bf16.msra.mxu0 0
    %388 = vmatprep.mubr.bf16.mxu0 %v314
    %389 = vmatmul.mubr.bf16.gmra.mrb[0].mxu0 %v157
    %v390 = vpop.f32.mrb[0].mxu0
    %v391 = vadd.f32 %v351, %v390
    %v392 = vpop.f32.mrb[0].mxu0
    %v393 = vpop.f32.mrb[0].mxu0
    %v394 = vpop.f32.mrb[0].mxu0
    %395 = vdwg.mxu0
    %v396 = vmax.f32 %v391, 0.0
    %v397 = vld [vmem:[%s3] sm:$0xf]
    %v398 = vld [vmem:[%s3 + $0x4] sm:$0xf]
    %v399 = vld [vmem:[%s3 + $0x8] sm:$0xf]
    %v400 = vld [vmem:[%s3 + $0xc] sm:$0xf]
    %v401 = vld [vmem:[%s3 + $0x10] sm:$0xf]
    %v402 = vld [vmem:[%s3 + $0x14] sm:$0xf]
    %v403 = vld [vmem:[%s3 + $0x18] sm:$0xf]
    %v404 = vld [vmem:[%s3 + $0x1c] sm:$0xf]
    %v405 = vld [vmem:[%s3 + $0x20] sm:$0xf]
    %v406 = vld [vmem:[%s3 + $0x24] sm:$0xf]
    %v407 = vld [vmem:[%s3 + $0x28] sm:$0xf]
    %v408 = vld [vmem:[%s3 + $0x2c] sm:$0xf]
    %v409 = vld [vmem:[%s3 + $0x30] sm:$0x3]
    %v410 = vld [vmem:[%s4] sm:$0x1]
    %v411 = vunpack.c.l.bf16 %v410
    %v412 = vlaneseq
    %v413 = vshrl.u32 %v412, 7
    %v414 = vsub.s32 0, %v413
    %v415 = vrot.slane %v411, %v414
    %v429 = vunpack.c.l.b16 %v397
    %v430 = vunpack.c.l.b16 %v398
    %v431 = vunpack.c.l.b16 %v399
    %v432 = vunpack.c.l.b16 %v400
    %v433 = vunpack.c.l.b16 %v401
    %v434 = vunpack.c.l.b16 %v402
    %v435 = vunpack.c.l.b16 %v403
    %v436 = vunpack.c.l.b16 %v404
    %v437 = vunpack.c.l.b16 %v405
    %v438 = vunpack.c.l.b16 %v406
    %v439 = vunpack.c.l.b16 %v407
    %v440 = vunpack.c.l.b16 %v408
    %v441 = vunpack.c.l.b16 %v409
    %v442 = vpack.c.b16 %v430, %v429
    %v443 = vpack.c.b16 %v432, %v431
    %v444 = vpack.c.b16 %v434, %v433
    %v445 = vpack.c.b16 %v436, %v435
    %v446 = vpack.c.b16 %v438, %v437
    %v447 = vpack.c.b16 %v440, %v439
    %v448 = vpack.c.b16 %v441, %v441
    %vm455 = vcmask 818176
    %v457 = vsel %vm455, %v396, 0
    %vm459 = vcmask 1041408
    %v461 = vsel %vm459, %v448, 0
    %463 = vmatprep.subr.bf16.mxu0 0
    %464 = vmatpush1.bf16.msra.mxu0 %v442
    %465 = vmatprep.subr.bf16.mxu0 0
    %466 = vmatpush1.bf16.msra.mxu0 %v443
    %467 = vmatprep.subr.bf16.mxu0 0
    %468 = vmatpush1.bf16.msra.mxu0 %v444
    %469 = vmatprep.subr.bf16.mxu0 0
    %470 = vmatpush1.bf16.msra.mxu0 %v445
    %471 = vmatprep.subr.bf16.mxu0 0
    %472 = vmatpush1.bf16.msra.mxu0 %v446
    %473 = vmatprep.subr.bf16.mxu0 0
    %474 = vmatpush1.bf16.msra.mxu0 %v447
    %475 = vmatprep.subr.bf16.mxu0 0
    %476 = vmatpush1.bf16.msra.mxu0 %v461
    %477 = vmatprep.subr.bf16.mxu0 0
    %478 = vmatpush1.bf16.msra.mxu0 0
    %479 = vmatprep.subr.bf16.mxu0 0
    %480 = vmatpush1.bf16.msra.mxu0 0
    %481 = vmatprep.subr.bf16.mxu0 0
    %482 = vmatpush1.bf16.msra.mxu0 0
    %483 = vmatprep.subr.bf16.mxu0 0
    %484 = vmatpush1.bf16.msra.mxu0 0
    %485 = vmatprep.subr.bf16.mxu0 0
    %486 = vmatpush1.bf16.msra.mxu0 0
    %487 = vmatprep.subr.bf16.mxu0 0
    %488 = vmatpush1.bf16.msra.mxu0 0
    %489 = vmatprep.subr.bf16.mxu0 0
    %490 = vmatpush1.bf16.msra.mxu0 0
    %491 = vmatprep.subr.bf16.mxu0 0
    %492 = vmatpush1.bf16.msra.mxu0 0
    %493 = vmatprep.subr.bf16.mxu0 0
    %494 = vmatpush1.bf16.msra.mxu0 0
    %495 = vmatprep.mubr.f32.mxu0 0.0
    %496 = vmatmul.mubr.f32.gmra.mrb[0].mxu0 %v457
    %v497 = vpop.f32.mrb[0].mxu0
    %v498 = vadd.f32 %v415, %v497
    %v499 = vpop.f32.mrb[0].mxu0
    %500 = vdwg.mxu0
    %v501 = vmax.f32 %v498, 0.0
    %v502 = vld [vmem:[%s5] sm:$0xf]
    %v503 = vld [vmem:[%s5 + $0x4] sm:$0xf]
    %v504 = vld [vmem:[%s5 + $0x8] sm:$0x3]
    %v505 = vld [vmem:[%s6] sm:$0x1]
    %v506 = vunpack.c.l.bf16 %v505
    %v507 = vlaneseq
    %v508 = vshrl.u32 %v507, 7
    %v509 = vsub.s32 0, %v508
    %v510 = vrot.slane %v506, %v509
    %v514 = vunpack.c.l.b16 %v502
    %v515 = vunpack.c.l.b16 %v503
    %v516 = vunpack.c.l.b16 %v504
    %v517 = vpack.c.b16 %v515, %v514
    %v518 = vpack.c.b16 %v516, %v516
    %vm520 = vcmask 162816
    %v522 = vsel %vm520, %v501, 0
    %v525 = vsel %vm459, %v518, 0
    %527 = vmatprep.subr.bf16.mxu0 0
    %528 = vmatpush1.bf16.msra.mxu0 %v517
    %529 = vmatprep.subr.bf16.mxu0 0
    %530 = vmatpush1.bf16.msra.mxu0 %v525
    %531 = vmatprep.subr.bf16.mxu0 0
    %532 = vmatpush1.bf16.msra.mxu0 0
    %533 = vmatprep.subr.bf16.mxu0 0
    %534 = vmatpush1.bf16.msra.mxu0 0
    %535 = vmatprep.subr.bf16.mxu0 0
    %536 = vmatpush1.bf16.msra.mxu0 0
    %537 = vmatprep.subr.bf16.mxu0 0
    %538 = vmatpush1.bf16.msra.mxu0 0
    %539 = vmatprep.subr.bf16.mxu0 0
    %540 = vmatpush1.bf16.msra.mxu0 0
    %541 = vmatprep.subr.bf16.mxu0 0
    %542 = vmatpush1.bf16.msra.mxu0 0
    %543 = vmatprep.subr.bf16.mxu0 0
    %544 = vmatpush1.bf16.msra.mxu0 0
    %545 = vmatprep.subr.bf16.mxu0 0
    %546 = vmatpush1.bf16.msra.mxu0 0
    %547 = vmatprep.subr.bf16.mxu0 0
    %548 = vmatpush1.bf16.msra.mxu0 0
    %549 = vmatprep.subr.bf16.mxu0 0
    %550 = vmatpush1.bf16.msra.mxu0 0
    %551 = vmatprep.subr.bf16.mxu0 0
    %552 = vmatpush1.bf16.msra.mxu0 0
    %553 = vmatprep.subr.bf16.mxu0 0
    %554 = vmatpush1.bf16.msra.mxu0 0
    %555 = vmatprep.subr.bf16.mxu0 0
    %556 = vmatpush1.bf16.msra.mxu0 0
    %557 = vmatprep.subr.bf16.mxu0 0
    %558 = vmatpush1.bf16.msra.mxu0 0
    %559 = vmatprep.mubr.f32.mxu0 0.0
    %560 = vmatmul.mubr.f32.gmra.mrb[0].mxu0 %v522
    %v561 = vpop.f32.mrb[0].mxu0
    %v562 = vadd.f32 %v510, %v561
    %v563 = vpop.f32.mrb[0].mxu0
    %564 = vdwg.mxu0
    %v565 = vmax.f32 %v562, 0.0
    %v566 = vld [vmem:[%s7] sm:$0xf]
    %v567 = vld [vmem:[%s7 + $0x4] sm:$0xf]
    %v568 = vld [vmem:[%s7 + $0x8] sm:$0xf]
    %v569 = vld [vmem:[%s7 + $0xc] sm:$0xf]
    %v570 = vld [vmem:[%s7 + $0x10] sm:$0xf]
    %v571 = vld [vmem:[%s7 + $0x14] sm:$0xf]
    %v572 = vld [vmem:[%s7 + $0x18] sm:$0x1]
    %v573 = vld [vmem:[%s8] sm:$0x1]
    %v574 = vunpack.c.l.bf16 %v573
    %v575 = vlaneseq
    %v576 = vshrl.u32 %v575, 7
    %v577 = vsub.s32 0, %v576
    %v578 = vrot.slane %v574, %v577
    %v586 = vunpack.c.l.b16 %v566
    %v587 = vunpack.c.l.b16 %v567
    %v588 = vunpack.c.l.b16 %v568
    %v589 = vunpack.c.l.b16 %v569
    %v590 = vunpack.c.l.b16 %v570
    %v591 = vunpack.c.l.b16 %v571
    %v592 = vunpack.c.l.b16 %v572
    %v593 = vpack.c.b16 %v587, %v586
    %v594 = vpack.c.b16 %v589, %v588
    %v595 = vpack.c.b16 %v591, %v590
    %v596 = vpack.c.b16 %v592, %v592
    %vm600 = vcmask 408576
    %v602 = vsel %vm600, %v565, 0
    %vm604 = vcmask 1040384
    %v606 = vsel %vm604, %v596, 0
    %608 = vmatprep.subr.bf16.mxu0 0
    %609 = vmatpush1.bf16.msra.mxu0 %v593
    %610 = vmatprep.subr.bf16.mxu0 0
    %611 = vmatpush1.bf16.msra.mxu0 %v594
    %612 = vmatprep.subr.bf16.mxu0 0
    %613 = vmatpush1.bf16.msra.mxu0 %v595
    %614 = vmatprep.subr.bf16.mxu0 0
    %615 = vmatpush1.bf16.msra.mxu0 %v606
    %616 = vmatprep.subr.bf16.mxu0 0
    %617 = vmatpush1.bf16.msra.mxu0 0
    %618 = vmatprep.subr.bf16.mxu0 0
    %619 = vmatpush1.bf16.msra.mxu0 0
    %620 = vmatprep.subr.bf16.mxu0 0
    %621 = vmatpush1.bf16.msra.mxu0 0
    %622 = vmatprep.subr.bf16.mxu0 0
    %623 = vmatpush1.bf16.msra.mxu0 0
    %624 = vmatprep.subr.bf16.mxu0 0
    %625 = vmatpush1.bf16.msra.mxu0 0
    %626 = vmatprep.subr.bf16.mxu0 0
    %627 = vmatpush1.bf16.msra.mxu0 0
    %628 = vmatprep.subr.bf16.mxu0 0
    %629 = vmatpush1.bf16.msra.mxu0 0
    %630 = vmatprep.subr.bf16.mxu0 0
    %631 = vmatpush1.bf16.msra.mxu0 0
    %632 = vmatprep.subr.bf16.mxu0 0
    %633 = vmatpush1.bf16.msra.mxu0 0
    %634 = vmatprep.subr.bf16.mxu0 0
    %635 = vmatpush1.bf16.msra.mxu0 0
    %636 = vmatprep.subr.bf16.mxu0 0
    %637 = vmatpush1.bf16.msra.mxu0 0
    %638 = vmatprep.subr.bf16.mxu0 0
    %639 = vmatpush1.bf16.msra.mxu0 0
    %640 = vmatprep.mubr.f32.mxu0 0.0
    %641 = vmatmul.mubr.f32.gmra.mrb[0].mxu0 %v602
    %v642 = vpop.f32.mrb[0].mxu0
    %v643 = vadd.f32 %v578, %v642
    %v644 = vpop.f32.mrb[0].mxu0
    %645 = vdwg.mxu0
    %v646 = vpack.c.bf16 %v643, %v643
    %v649 = vunpack.c.l.s4 1966171168
    %v650 = vunpack.c.0.s8 %v649
    %v651 = vlaneseq
    %v652 = vshrl.u32 %v651, 7
    %v653 = vsub.s32 %v650, %v652
    %v654 = vrot.slane %v646, %v653
    %v655 = vcombine.high %v654, %v654
    %v657 = vunpack.c.l.s4 1966171168
    %v658 = vunpack.c.0.s8 %v657
    %v659 = vlaneseq
    %v660 = vshrl.u32 %v659, 7
    %v661 = vsub.s32 %v658, %v660
    %v662 = vrot.slane %v654, %v661
    %v664 = vunpack.c.l.s4 1966171168
    %v665 = vunpack.c.0.s8 %v664
    %v666 = vlaneseq
    %v667 = vshrl.u32 %v666, 7
    %v668 = vsub.s32 %v665, %v667
    %v669 = vrot.slane %v655, %v668
    %v670 = vcombine.high %v662, %v662
    %v671 = vcombine.high %v669, %v669
    %676 = vst [vmem:[#allocation2] sm:$0x1] %v662
    %677 = vst [vmem:[#allocation2 + $0x1] sm:$0x1] %v669
    %678 = vst [vmem:[#allocation2 + $0x2] sm:$0x1] %v670
    %679 = vst [vmem:[#allocation2 + $0x3] sm:$0x1] %v671
    %v680 = vld [vmem:[%s9] sm:$0xf]
    %v681 = vld [vmem:[%s9 + $0x4] sm:$0xf]
    %v682 = vld [vmem:[%s9 + $0x8] sm:$0xf]
    %v683 = vld [vmem:[%s9 + $0xc] sm:$0xf]
    %v684 = vld [vmem:[%s9 + $0x10] sm:$0xf]
    %v685 = vld [vmem:[%s9 + $0x14] sm:$0xf]
    %v686 = vld [vmem:[%s9 + $0x18] sm:$0xf]
    %v687 = vld [vmem:[%s9 + $0x1c] sm:$0xf]
    %v688 = vld [vmem:[%s9 + $0x20] sm:$0xf]
    %v689 = vld [vmem:[%s9 + $0x24] sm:$0xf]
    %v690 = vld [vmem:[%s9 + $0x28] sm:$0xf]
    %v691 = vld [vmem:[%s9 + $0x2c] sm:$0xf]
    %v692 = vld [vmem:[%s9 + $0x30] sm:$0xf]
    %v693 = vld [vmem:[%s9 + $0x34] sm:$0xf]
    %v694 = vld [vmem:[%s9 + $0x38] sm:$0xf]
    %v695 = vld [vmem:[%s9 + $0x3c] sm:$0xf]
    %v696 = vld [vmem:[%s10] sm:$0x1]
    %v697 = vunpack.c.l.bf16 %v696
    %v698 = vlaneseq
    %v699 = vshrl.u32 %v698, 7
    %v700 = vsub.s32 0, %v699
    %v701 = vrot.slane %v697, %v700
    %v718 = vunpack.c.l.b16 %v680
    %v719 = vunpack.c.l.b16 %v681
    %v720 = vunpack.c.l.b16 %v682
    %v721 = vunpack.c.l.b16 %v683
    %v722 = vunpack.c.l.b16 %v684
    %v723 = vunpack.c.l.b16 %v685
    %v724 = vunpack.c.l.b16 %v686
    %v725 = vunpack.c.l.b16 %v687
    %v726 = vunpack.c.l.b16 %v688
    %v727 = vunpack.c.l.b16 %v689
    %v728 = vunpack.c.l.b16 %v690
    %v729 = vunpack.c.l.b16 %v691
    %v730 = vunpack.c.l.b16 %v692
    %v731 = vunpack.c.l.b16 %v693
    %v732 = vunpack.c.l.b16 %v694
    %v733 = vunpack.c.l.b16 %v695
    %v734 = vpack.c.b16 %v719, %v718
    %v735 = vpack.c.b16 %v721, %v720
    %v736 = vpack.c.b16 %v723, %v722
    %v737 = vpack.c.b16 %v725, %v724
    %v738 = vpack.c.b16 %v727, %v726
    %v739 = vpack.c.b16 %v729, %v728
    %v740 = vpack.c.b16 %v731, %v730
    %v741 = vpack.c.b16 %v733, %v732
    %750 = vmatprep.subr.bf16.mxu0 0
    %751 = vmatpush1.bf16.msra.mxu0 %v734
    %752 = vmatprep.subr.bf16.mxu0 0
    %753 = vmatpush1.bf16.msra.mxu0 %v735
    %754 = vmatprep.subr.bf16.mxu0 0
    %755 = vmatpush1.bf16.msra.mxu0 %v736
    %756 = vmatprep.subr.bf16.mxu0 0
    %757 = vmatpush1.bf16.msra.mxu0 %v737
    %758 = vmatprep.subr.bf16.mxu0 0
    %759 = vmatpush1.bf16.msra.mxu0 %v738
    %760 = vmatprep.subr.bf16.mxu0 0
    %761 = vmatpush1.bf16.msra.mxu0 %v739
    %762 = vmatprep.subr.bf16.mxu0 0
    %763 = vmatpush1.bf16.msra.mxu0 %v740
    %764 = vmatprep.subr.bf16.mxu0 0
    %765 = vmatpush1.bf16.msra.mxu0 %v741
    %766 = vmatprep.subr.bf16.mxu0 0
    %767 = vmatpush1.bf16.msra.mxu0 0
    %768 = vmatprep.subr.bf16.mxu0 0
    %769 = vmatpush1.bf16.msra.mxu0 0
    %770 = vmatprep.subr.bf16.mxu0 0
    %771 = vmatpush1.bf16.msra.mxu0 0
    %772 = vmatprep.subr.bf16.mxu0 0
    %773 = vmatpush1.bf16.msra.mxu0 0
    %774 = vmatprep.subr.bf16.mxu0 0
    %775 = vmatpush1.bf16.msra.mxu0 0
    %776 = vmatprep.subr.bf16.mxu0 0
    %777 = vmatpush1.bf16.msra.mxu0 0
    %778 = vmatprep.subr.bf16.mxu0 0
    %779 = vmatpush1.bf16.msra.mxu0 0
    %780 = vmatprep.subr.bf16.mxu0 0
    %781 = vmatpush1.bf16.msra.mxu0 0
    %782 = vmatprep.mubr.f32.mxu0 0.0
    %783 = vmatmul.mubr.f32.gmra.mrb[0].mxu0 %v643
    %v784 = vpop.f32.mrb[0].mxu0
    %v785 = vadd.f32 %v701, %v784
    %v786 = vpop.f32.mrb[0].mxu0
    %787 = vdwg.mxu0
    %v788 = vmax.f32 %v785, 0.0
    %v789 = vld [vmem:[%s11] sm:$0xf]
    %v790 = vld [vmem:[%s11 + $0x4] sm:$0xf]
    %v791 = vld [vmem:[%s11 + $0x8] sm:$0xf]
    %v792 = vld [vmem:[%s11 + $0xc] sm:$0xf]
    %v793 = vld [vmem:[%s11 + $0x10] sm:$0xf]
    %v794 = vld [vmem:[%s11 + $0x14] sm:$0xf]
    %v795 = vld [vmem:[%s11 + $0x18] sm:$0x1]
    %v796 = vld [vmem:[%s12] sm:$0x1]
    %v797 = vunpack.c.l.bf16 %v796
    %v798 = vlaneseq
    %v799 = vshrl.u32 %v798, 7
    %v800 = vsub.s32 0, %v799
    %v801 = vrot.slane %v797, %v800
    %v809 = vunpack.c.l.b16 %v789
    %v810 = vunpack.c.l.b16 %v790
    %v811 = vunpack.c.l.b16 %v791
    %v812 = vunpack.c.l.b16 %v792
    %v813 = vunpack.c.l.b16 %v793
    %v814 = vunpack.c.l.b16 %v794
    %v815 = vunpack.c.l.b16 %v795
    %v816 = vpack.c.b16 %v810, %v809
    %v817 = vpack.c.b16 %v812, %v811
    %v818 = vpack.c.b16 %v814, %v813
    %v819 = vpack.c.b16 %v815, %v815
    %v824 = vsel %vm600, %v788, 0
    %v827 = vsel %vm604, %v819, 0
    %829 = vmatprep.subr.bf16.mxu0 0
    %830 = vmatpush1.bf16.msra.mxu0 %v816
    %831 = vmatprep.subr.bf16.mxu0 0
    %832 = vmatpush1.bf16.msra.mxu0 %v817
    %833 = vmatprep.subr.bf16.mxu0 0
    %834 = vmatpush1.bf16.msra.mxu0 %v818
    %835 = vmatprep.subr.bf16.mxu0 0
    %836 = vmatpush1.bf16.msra.mxu0 %v827
    %837 = vmatprep.subr.bf16.mxu0 0
    %838 = vmatpush1.bf16.msra.mxu0 0
    %839 = vmatprep.subr.bf16.mxu0 0
    %840 = vmatpush1.bf16.msra.mxu0 0
    %841 = vmatprep.subr.bf16.mxu0 0
    %842 = vmatpush1.bf16.msra.mxu0 0
    %843 = vmatprep.subr.bf16.mxu0 0
    %844 = vmatpush1.bf16.msra.mxu0 0
    %845 = vmatprep.subr.bf16.mxu0 0
    %846 = vmatpush1.bf16.msra.mxu0 0
    %847 = vmatprep.subr.bf16.mxu0 0
    %848 = vmatpush1.bf16.msra.mxu0 0
    %849 = vmatprep.subr.bf16.mxu0 0
    %850 = vmatpush1.bf16.msra.mxu0 0
    %851 = vmatprep.subr.bf16.mxu0 0
    %852 = vmatpush1.bf16.msra.mxu0 0
    %853 = vmatprep.subr.bf16.mxu0 0
    %854 = vmatpush1.bf16.msra.mxu0 0
    %855 = vmatprep.subr.bf16.mxu0 0
    %856 = vmatpush1.bf16.msra.mxu0 0
    %857 = vmatprep.subr.bf16.mxu0 0
    %858 = vmatpush1.bf16.msra.mxu0 0
    %859 = vmatprep.subr.bf16.mxu0 0
    %860 = vmatpush1.bf16.msra.mxu0 0
    %861 = vmatprep.mubr.f32.mxu0 0.0
    %862 = vmatmul.mubr.f32.gmra.mrb[0].mxu0 %v824
    %v863 = vpop.f32.mrb[0].mxu0
    %v864 = vadd.f32 %v801, %v863
    %v865 = vpop.f32.mrb[0].mxu0
    %866 = vdwg.mxu0
    %v867 = vmax.f32 %v864, 0.0
    %v868 = vld [vmem:[%s13] sm:$0xf]
    %v869 = vld [vmem:[%s13 + $0x4] sm:$0xf]
    %v870 = vld [vmem:[%s13 + $0x8] sm:$0x3]
    %v871 = vld [vmem:[%s14] sm:$0x1]
    %v872 = vunpack.c.l.bf16 %v871
    %v873 = vlaneseq
    %v874 = vshrl.u32 %v873, 7
    %v875 = vsub.s32 0, %v874
    %v876 = vrot.slane %v872, %v875
    %v880 = vunpack.c.l.b16 %v868
    %v881 = vunpack.c.l.b16 %v869
    %v882 = vunpack.c.l.b16 %v870
    %v883 = vpack.c.b16 %v881, %v880
    %v884 = vpack.c.b16 %v882, %v882
    %v887 = vsel %vm520, %v867, 0
    %v890 = vsel %vm459, %v884, 0
    %892 = vmatprep.subr.bf16.mxu0 0
    %893 = vmatpush1.bf16.msra.mxu0 %v883
    %894 = vmatprep.subr.bf16.mxu0 0
    %895 = vmatpush1.bf16.msra.mxu0 %v890
    %896 = vmatprep.subr.bf16.mxu0 0
    %897 = vmatpush1.bf16.msra.mxu0 0
    %898 = vmatprep.subr.bf16.mxu0 0
    %899 = vmatpush1.bf16.msra.mxu0 0
    %900 = vmatprep.subr.bf16.mxu0 0
    %901 = vmatpush1.bf16.msra.mxu0 0
    %902 = vmatprep.subr.bf16.mxu0 0
    %903 = vmatpush1.bf16.msra.mxu0 0
    %904 = vmatprep.subr.bf16.mxu0 0
    %905 = vmatpush1.bf16.msra.mxu0 0
    %906 = vmatprep.subr.bf16.mxu0 0
    %907 = vmatpush1.bf16.msra.mxu0 0
    %908 = vmatprep.subr.bf16.mxu0 0
    %909 = vmatpush1.bf16.msra.mxu0 0
    %910 = vmatprep.subr.bf16.mxu0 0
    %911 = vmatpush1.bf16.msra.mxu0 0
    %912 = vmatprep.subr.bf16.mxu0 0
    %913 = vmatpush1.bf16.msra.mxu0 0
    %914 = vmatprep.subr.bf16.mxu0 0
    %915 = vmatpush1.bf16.msra.mxu0 0
    %916 = vmatprep.subr.bf16.mxu0 0
    %917 = vmatpush1.bf16.msra.mxu0 0
    %918 = vmatprep.subr.bf16.mxu0 0
    %919 = vmatpush1.bf16.msra.mxu0 0
    %920 = vmatprep.subr.bf16.mxu0 0
    %921 = vmatpush1.bf16.msra.mxu0 0
    %922 = vmatprep.subr.bf16.mxu0 0
    %923 = vmatpush1.bf16.msra.mxu0 0
    %924 = vmatprep.mubr.f32.mxu0 0.0
    %925 = vmatmul.mubr.f32.gmra.mrb[0].mxu0 %v887
    %v926 = vpop.f32.mrb[0].mxu0
    %v927 = vadd.f32 %v876, %v926
    %v928 = vpop.f32.mrb[0].mxu0
    %929 = vdwg.mxu0
    %v930 = vmax.f32 %v927, 0.0
    %v931 = vld [vmem:[%s15] sm:$0xff]
    %v932 = vld [vmem:[%s15 + $0x8] sm:$0xff]
    %v933 = vld [vmem:[%s15 + $0x10] sm:$0xff]
    %v934 = vld [vmem:[%s15 + $0x18] sm:$0xff]
    %v935 = vld [vmem:[%s15 + $0x20] sm:$0xff]
    %v936 = vld [vmem:[%s15 + $0x28] sm:$0xff]
    %v937 = vld [vmem:[%s15 + $0x30] sm:$0xff]
    %v938 = vld [vmem:[%s15 + $0x38] sm:$0xff]
    %v939 = vld [vmem:[%s15 + $0x40] sm:$0xff]
    %v940 = vld [vmem:[%s15 + $0x48] sm:$0xff]
    %v941 = vld [vmem:[%s15 + $0x50] sm:$0xff]
    %v942 = vld [vmem:[%s15 + $0x58] sm:$0xff]
    %v943 = vld [vmem:[%s15 + $0x60] sm:$0xff]
    %v944 = vld [vmem:[%s15 + $0x68] sm:$0xff]
    %v945 = vld [vmem:[%s15 + $0x70] sm:$0xff]
    %v946 = vld [vmem:[%s15 + $0x78] sm:$0xff]
    %v947 = vld [vmem:[%s15 + $0x80] sm:$0xff]
    %v948 = vld [vmem:[%s15 + $0x88] sm:$0xff]
    %v949 = vld [vmem:[%s15 + $0x90] sm:$0xff]
    %v950 = vld [vmem:[%s15 + $0x98] sm:$0xff]
    %v951 = vld [vmem:[%s15 + $0xa0] sm:$0xff]
    %v952 = vld [vmem:[%s15 + $0xa8] sm:$0xff]
    %v953 = vld [vmem:[%s15 + $0xb0] sm:$0xff]
    %v954 = vld [vmem:[%s15 + $0xb8] sm:$0xff]
    %v955 = vld [vmem:[%s15 + $0xc0] sm:$0x33]
    %v956 = vld [vmem:[%s15 + $0xc8] sm:$0x33]
    %v957 = vld [vmem:[%s16] sm:$0xf]
    %v958 = vunpack.c.l.bf16 %v957
    %v960 = vlaneseq
    %v961 = vshrl.u32 %v960, 7
    %v962 = vsub.s32 0, %v961
    %v963 = vrot.slane %v958, %v962
    %v964 = vlaneseq
    %v965 = vshrl.u32 %v964, 7
    %v966 = vsub.s32 2, %v965
    %v967 = vrot.slane %v958, %v966
    %v968 = vlaneseq
    %v969 = vshrl.u32 %v968, 7
    %v970 = vsub.s32 4, %v969
    %v971 = vrot.slane %v958, %v970
    %v972 = vlaneseq
    %v973 = vshrl.u32 %v972, 7
    %v974 = vsub.s32 6, %v973
    %v975 = vrot.slane %v958, %v974
    %v980 = vlaneseq
    %v981 = vshrl.u32 %v980, 7
    %v982 = vsub.s32 0, %v981
    %v983 = vrot.slane %v963, %v982
    %v984 = vlaneseq
    %v985 = vshrl.u32 %v984, 7
    %v986 = vsub.s32 0, %v985
    %v987 = vrot.slane %v967, %v986
    %v988 = vlaneseq
    %v989 = vshrl.u32 %v988, 7
    %v990 = vsub.s32 0, %v989
    %v991 = vrot.slane %v971, %v990
    %v992 = vlaneseq
    %v993 = vshrl.u32 %v992, 7
    %v994 = vsub.s32 0, %v993
    %v995 = vrot.slane %v975, %v994
    %v1022 = vunpack.c.l.b16 %v931
    %v1023 = vunpack.c.h.b16 %v931
    %v1024 = vunpack.c.l.b16 %v932
    %v1025 = vunpack.c.h.b16 %v932
    %v1026 = vunpack.c.l.b16 %v933
    %v1027 = vunpack.c.h.b16 %v933
    %v1028 = vunpack.c.l.b16 %v934
    %v1029 = vunpack.c.h.b16 %v934
    %v1030 = vunpack.c.l.b16 %v935
    %v1031 = vunpack.c.h.b16 %v935
    %v1032 = vunpack.c.l.b16 %v936
    %v1033 = vunpack.c.h.b16 %v936
    %v1034 = vunpack.c.l.b16 %v937
    %v1035 = vunpack.c.h.b16 %v937
    %v1036 = vunpack.c.l.b16 %v938
    %v1037 = vunpack.c.h.b16 %v938
    %v1038 = vunpack.c.l.b16 %v939
    %v1039 = vunpack.c.h.b16 %v939
    %v1040 = vunpack.c.l.b16 %v940
    %v1041 = vunpack.c.h.b16 %v940
    %v1042 = vunpack.c.l.b16 %v941
    %v1043 = vunpack.c.h.b16 %v941
    %v1044 = vunpack.c.l.b16 %v942
    %v1045 = vunpack.c.h.b16 %v942
    %v1046 = vunpack.c.l.b16 %v943
    %v1047 = vunpack.c.h.b16 %v943
    %v1048 = vunpack.c.l.b16 %v944
    %v1049 = vunpack.c.h.b16 %v944
    %v1050 = vunpack.c.l.b16 %v945
    %v1051 = vunpack.c.h.b16 %v945
    %v1052 = vunpack.c.l.b16 %v946
    %v1053 = vunpack.c.h.b16 %v946
    %v1054 = vunpack.c.l.b16 %v947
    %v1055 = vunpack.c.h.b16 %v947
    %v1056 = vunpack.c.l.b16 %v948
    %v1057 = vunpack.c.h.b16 %v948
    %v1058 = vunpack.c.l.b16 %v949
    %v1059 = vunpack.c.h.b16 %v949
    %v1060 = vunpack.c.l.b16 %v950
    %v1061 = vunpack.c.h.b16 %v950
    %v1062 = vunpack.c.l.b16 %v951
    %v1063 = vunpack.c.h.b16 %v951
    %v1064 = vunpack.c.l.b16 %v952
    %v1065 = vunpack.c.h.b16 %v952
    %v1066 = vunpack.c.l.b16 %v953
    %v1067 = vunpack.c.h.b16 %v953
    %v1068 = vunpack.c.l.b16 %v954
    %v1069 = vunpack.c.h.b16 %v954
    %v1070 = vunpack.c.l.b16 %v955
    %v1071 = vunpack.c.h.b16 %v955
    %v1072 = vunpack.c.l.b16 %v956
    %v1073 = vunpack.c.h.b16 %v956
    %v1074 = vpack.c.b16 %v1026, %v1022
    %v1075 = vpack.c.b16 %v1027, %v1023
    %v1076 = vpack.c.b16 %v1028, %v1024
    %v1077 = vpack.c.b16 %v1029, %v1025
    %v1078 = vpack.c.b16 %v1034, %v1030
    %v1079 = vpack.c.b16 %v1035, %v1031
    %v1080 = vpack.c.b16 %v1036, %v1032
    %v1081 = vpack.c.b16 %v1037, %v1033
    %v1082 = vpack.c.b16 %v1042, %v1038
    %v1083 = vpack.c.b16 %v1043, %v1039
    %v1084 = vpack.c.b16 %v1044, %v1040
    %v1085 = vpack.c.b16 %v1045, %v1041
    %v1086 = vpack.c.b16 %v1050, %v1046
    %v1087 = vpack.c.b16 %v1051, %v1047
    %v1088 = vpack.c.b16 %v1052, %v1048
    %v1089 = vpack.c.b16 %v1053, %v1049
    %v1090 = vpack.c.b16 %v1058, %v1054
    %v1091 = vpack.c.b16 %v1059, %v1055
    %v1092 = vpack.c.b16 %v1060, %v1056
    %v1093 = vpack.c.b16 %v1061, %v1057
    %v1094 = vpack.c.b16 %v1066, %v1062
    %v1095 = vpack.c.b16 %v1067, %v1063
    %v1096 = vpack.c.b16 %v1068, %v1064
    %v1097 = vpack.c.b16 %v1069, %v1065
    %v1098 = vpack.c.b16 %v1070, %v1070
    %v1099 = vpack.c.b16 %v1071, %v1071
    %v1100 = vpack.c.b16 %v1072, %v1072
    %v1101 = vpack.c.b16 %v1073, %v1073
    %v1127 = vsel %vm455, %v930, 0
    %v1130 = vsel %vm459, %v1098, 0
    %v1133 = vsel %vm459, %v1099, 0
    %v1136 = vsel %vm459, %v1100, 0
    %v1139 = vsel %vm459, %v1101, 0
    %1141 = vmatprep.subr.bf16.mxu0 %v1075
    %1142 = vmatpush1.bf16.msra.mxu0 %v1074
    %1143 = vmatprep.subr.bf16.mxu0 %v1079
    %1144 = vmatpush1.bf16.msra.mxu0 %v1078
    %1145 = vmatprep.subr.bf16.mxu0 %v1083
    %1146 = vmatpush1.bf16.msra.mxu0 %v1082
    %1147 = vmatprep.subr.bf16.mxu0 %v1087
    %1148 = vmatpush1.bf16.msra.mxu0 %v1086
    %1149 = vmatprep.subr.bf16.mxu0 %v1091
    %1150 = vmatpush1.bf16.msra.mxu0 %v1090
    %1151 = vmatprep.subr.bf16.mxu0 %v1095
    %1152 = vmatpush1.bf16.msra.mxu0 %v1094
    %1153 = vmatprep.subr.bf16.mxu0 %v1133
    %1154 = vmatpush1.bf16.msra.mxu0 %v1130
    %1155 = vmatprep.subr.bf16.mxu0 0
    %1156 = vmatpush1.bf16.msra.mxu0 0
    %1157 = vmatprep.subr.bf16.mxu0 0
    %1158 = vmatpush1.bf16.msra.mxu0 0
    %1159 = vmatprep.subr.bf16.mxu0 0
    %1160 = vmatpush1.bf16.msra.mxu0 0
    %1161 = vmatprep.subr.bf16.mxu0 0
    %1162 = vmatpush1.bf16.msra.mxu0 0
    %1163 = vmatprep.subr.bf16.mxu0 0
    %1164 = vmatpush1.bf16.msra.mxu0 0
    %1165 = vmatprep.subr.bf16.mxu0 0
    %1166 = vmatpush1.bf16.msra.mxu0 0
    %1167 = vmatprep.subr.bf16.mxu0 0
    %1168 = vmatpush1.bf16.msra.mxu0 0
    %1169 = vmatprep.subr.bf16.mxu0 0
    %1170 = vmatpush1.bf16.msra.mxu0 0
    %1171 = vmatprep.subr.bf16.mxu0 0
    %1172 = vmatpush1.bf16.msra.mxu0 0
    %1173 = vmatprep.mubr.f32.mxu0 0.0
    %1174 = vmatmul.mubr.f32.gmra.mrb[0].mxu0 %v1127
    %v1175 = vpop.f32.mrb[0].mxu0
    %v1176 = vadd.f32 %v983, %v1175
    %v1177 = vpop.f32.mrb[0].mxu0
    %v1178 = vadd.f32 %v987, %v1177
    %1179 = vdwg.mxu0
    %1180 = vmatprep.subr.bf16.mxu0 %v1077
    %1181 = vmatpush1.bf16.msra.mxu0 %v1076
    %1182 = vmatprep.subr.bf16.mxu0 %v1081
    %1183 = vmatpush1.bf16.msra.mxu0 %v1080
    %1184 = vmatprep.subr.bf16.mxu0 %v1085
    %1185 = vmatpush1.bf16.msra.mxu0 %v1084
    %1186 = vmatprep.subr.bf16.mxu0 %v1089
    %1187 = vmatpush1.bf16.msra.mxu0 %v1088
    %1188 = vmatprep.subr.bf16.mxu0 %v1093
    %1189 = vmatpush1.bf16.msra.mxu0 %v1092
    %1190 = vmatprep.subr.bf16.mxu0 %v1097
    %1191 = vmatpush1.bf16.msra.mxu0 %v1096
    %1192 = vmatprep.subr.bf16.mxu0 %v1139
    %1193 = vmatpush1.bf16.msra.mxu0 %v1136
    %1194 = vmatprep.subr.bf16.mxu0 0
    %1195 = vmatpush1.bf16.msra.mxu0 0
    %1196 = vmatprep.subr.bf16.mxu0 0
    %1197 = vmatpush1.bf16.msra.mxu0 0
    %1198 = vmatprep.subr.bf16.mxu0 0
    %1199 = vmatpush1.bf16.msra.mxu0 0
    %1200 = vmatprep.subr.bf16.mxu0 0
    %1201 = vmatpush1.bf16.msra.mxu0 0
    %1202 = vmatprep.subr.bf16.mxu0 0
    %1203 = vmatpush1.bf16.msra.mxu0 0
    %1204 = vmatprep.subr.bf16.mxu0 0
    %1205 = vmatpush1.bf16.msra.mxu0 0
    %1206 = vmatprep.subr.bf16.mxu0 0
    %1207 = vmatpush1.bf16.msra.mxu0 0
    %1208 = vmatprep.subr.bf16.mxu0 0
    %1209 = vmatpush1.bf16.msra.mxu0 0
    %1210 = vmatprep.subr.bf16.mxu0 0
    %1211 = vmatpush1.bf16.msra.mxu0 0
    %1212 = vmatprep.mubr.f32.mxu0 0.0
    %1213 = vmatmul.mubr.f32.gmra.mrb[0].mxu0 %v1127
    %v1214 = vpop.f32.mrb[0].mxu0
    %v1215 = vadd.f32 %v991, %v1214
    %v1216 = vpop.f32.mrb[0].mxu0
    %v1217 = vadd.f32 %v995, %v1216
    %1218 = vdwg.mxu0
    %v1219 = vxor.u32 %v1176, 2147483648
    %v1220 = vxor.u32 %v1178, 2147483648
    %v1221 = vxor.u32 %v1215, 2147483648
    %v1222 = vxor.u32 %v1217, 2147483648
    %v1223 = vmul.f32 %v1219, 1.442695
    %v1224 = vpow.pop %v1223
    %v1225 = vmul.f32 %v1220, 1.442695
    %v1226 = vpow.pop %v1225
    %v1227 = vmul.f32 %v1221, 1.442695
    %v1228 = vpow.pop %v1227
    %v1229 = vmul.f32 %v1222, 1.442695
    %v1230 = vpow.pop %v1229
    %v1231 = vadd.f32 %v1224, 1.0
    %v1232 = vadd.f32 %v1226, 1.0
    %v1233 = vadd.f32 %v1228, 1.0
    %v1234 = vadd.f32 %v1230, 1.0
    %v1235 = vrcp.pop %v1231
    %v1236 = vmul.f32 1.0, %v1235
    %v1237 = vrcp.pop %v1232
    %v1238 = vmul.f32 1.0, %v1237
    %v1239 = vrcp.pop %v1233
    %v1240 = vmul.f32 1.0, %v1239
    %v1241 = vrcp.pop %v1234
    %v1242 = vmul.f32 1.0, %v1241
    %v1243 = vpack.c.bf16 %v1236, %v1236
    %v1244 = vpack.c.bf16 %v1238, %v1238
    %v1245 = vpack.c.bf16 %v1240, %v1240
    %v1246 = vpack.c.bf16 %v1242, %v1242
    %v1251 = vcombine.low %v1243, %v1244
    %v1252 = vcombine.low %v1245, %v1246
    %v1254 = vunpack.c.l.s4 1966171168
    %v1255 = vunpack.c.0.s8 %v1254
    %v1256 = vlaneseq
    %v1257 = vshrl.u32 %v1256, 7
    %v1258 = vsub.s32 %v1255, %v1257
    %v1259 = vrot.slane %v1251, %v1258
    %v1261 = vunpack.c.l.s4 1966171168
    %v1262 = vunpack.c.0.s8 %v1261
    %v1263 = vlaneseq
    %v1264 = vshrl.u32 %v1263, 7
    %v1265 = vsub.s32 %v1262, %v1264
    %v1266 = vrot.slane %v1252, %v1265
    %v1267 = vcombine.low %v1259, %v1266
    %v1268 = vcombine.high %v1259, %v1266
    %v1270 = vunpack.c.l.s4 1966171168
    %v1271 = vunpack.c.0.s8 %v1270
    %v1272 = vlaneseq
    %v1273 = vshrl.u32 %v1272, 7
    %v1274 = vsub.s32 %v1271, %v1273
    %v1275 = vrot.slane %v1267, %v1274
    %v1277 = vunpack.c.l.s4 1966171168
    %v1278 = vunpack.c.0.s8 %v1277
    %v1279 = vlaneseq
    %v1280 = vshrl.u32 %v1279, 7
    %v1281 = vsub.s32 %v1278, %v1280
    %v1282 = vrot.slane %v1268, %v1281
    %v1283 = vcombine.high %v1275, %v1275
    %v1284 = vcombine.high %v1282, %v1282
    %vm1289 = vcmask 1041409
    %vm1290 = vmor %vm1289, %vm604
    %vm1291 = vcmask 1042434
    %vm1292 = vmor %vm1291, %vm1290
    %vm1293 = vcmask 125955
    %vm1294 = vmor %vm1293, %vm1292
    %1295 = vst.msk [vmem:[#allocation4] sm:$0xf] %vm1294, %v1275
    %1296 = vst.msk [vmem:[#allocation4 + $0x4] sm:$0xf] %vm1294, %v1282
    %1297 = vst.msk [vmem:[#allocation4 + $0x8] sm:$0xf] %vm1294, %v1283
    %1298 = vst.msk [vmem:[#allocation4 + $0xc] sm:$0xf] %vm1294, %v1284
    // Predicated region
    $region70: #{c_ae_forward.1} parent=1 // pred_check
      _
    $region71: #{c_ae_forward.1} parent=1 // pred_check_branch
      %1300 = sbr.rel (0) target = $region73
    $region72: #{c_ae_forward.1} parent=1 // pred_region
      %s1302 = ssub.s32 64, 16
      %1303 = vsyncadd [#allocation3], %s1302
      %s1304 = sshll.u32 [#allocation2], 4
      %s1305 = int_to_ptr.vmem [resolvable:$true] %s1304
      %1310 = dma.vmem_to_hbm [thread:$0]  %s1305, 16, %s17, [#allocation3], 16, 16, 1
    $region73: #{c_ae_forward.1} parent=1 // pred_fallthru
      _
    // Predicated region
    $region74: #{c_ae_forward.1} parent=1 // pred_check
      _
    $region75: #{c_ae_forward.1} parent=1 // pred_check_branch
      %1312 = sbr.rel (0) target = $region77
    $region76: #{c_ae_forward.1} parent=1 // pred_region
      %s1314 = ssub.s32 256, 64
      %1315 = vsyncadd [#allocation5], %s1314
      %s1316 = sshll.u32 [#allocation4], 4
      %s1317 = int_to_ptr.vmem [resolvable:$true] %s1316
      %1322 = dma.vmem_to_hbm [thread:$0]  %s1317, 64, %s18, [#allocation5], 64, 64, 4
    $region77: #{c_ae_forward.1} parent=1 // pred_fallthru
      _
    // Predicated region
    $region78: #{c_ae_forward.1} parent=1 // pred_check
      _
    $region79: #{c_ae_forward.1} parent=1 // pred_check_branch
      %1324 = sbr.rel (0) target = $region81
    $region80: #{c_ae_forward.1} parent=1 // pred_region
      %1325 = dma.done [#allocation3], 64
    $region81: #{c_ae_forward.1} parent=1 // pred_fallthru
      _
    // Predicated region
    $region82: #{c_ae_forward.1} parent=1 // pred_check
      _
    $region83: #{c_ae_forward.1} parent=1 // pred_check_branch
      %1327 = sbr.rel (0) target = $region85
    $region84: #{c_ae_forward.1} parent=1 // pred_region
      %1328 = dma.done [#allocation5], 256
    $region85: #{c_ae_forward.1} parent=1 // pred_fallthru
      _
    %1329 = vsyncpa [#allocation3], 1
    %1330 = vsyncpa [#allocation5], 1

</llo_original>
